<compile_context>
chip_gen: v6e
topology: v6e:2x2x1
jax: 0.10.0
libtpu: 0.0.40
codegen_flags: <defaults>
</compile_context>

<pallas_src>
import functools

import jax
import jax.numpy as jnp
from jax.experimental import pallas as pl
from jax.experimental.pallas import tpu as pltpu

EPS_NORM = 1e-8   # _norm_no_nan clamp
EPS_LN = 1e-5     # nn.LayerNorm default eps

# (scalar_act=relu?, vector_act=sigmoid?) per GVP, static.
MSG_ACTS = ((True, True), (True, True), (False, False))   # n_message = 3
FF_ACTS = ((True, True), (False, False))                   # n_feedforward = 2


def _round_up(x, m):
    return ((x + m - 1) // m) * m


def _vmem_limit_bytes():
    """Per-generation VMEM budget (~3/4 of physical: v5e/v6e ~96 MiB, v7x ~48 MiB)."""
    cap = 64 * 1024 * 1024
    try:
        info = pltpu.get_tpu_info()
        cap = int(getattr(info, "vmem_capacity_bytes", cap))
    except Exception:
        pass
    return min((cap // 4) * 3, 100 * 1024 * 1024)


# -----------------------------------------------------------------------------
# weight packing: per GVP stack, one matmul-dtype weight slab + one f32 bias slab
# -----------------------------------------------------------------------------
def _pack_gvp_weights(layers, matmul_dtype):
    """Returns (w_slab, b_slab, layout); layout[i][name] = (row, rows, cols).

    "wh"/"ws_s"/"ws_v"/"wv"/"wsv" index into w_slab, "bs"/"bsv" into b_slab.
    Row offsets are 8-aligned so in-kernel static slices are sublane-aligned.
    """
    layout = []
    w_entries, b_entries = [], []
    wrow = brow = wcols = bcols = 0
    for p in layers:
        lay = {}
        for name in ("wh", "ws_s", "ws_v", "wv", "wsv"):
            a = p[name]
            lay[name] = (wrow, a.shape[0], a.shape[1])
            w_entries.append((wrow, a))
            wrow = _round_up(wrow + a.shape[0], 8)
            wcols = max(wcols, a.shape[1])
        for name in ("bs", "bsv"):
            a = p[name]                                   # [1, d]
            lay[name] = (brow, 1, a.shape[1])
            b_entries.append((brow, a))
            brow += 8
            bcols = max(bcols, a.shape[1])
        layout.append(lay)
    w_slab = jnp.zeros((_round_up(wrow, 8), wcols), matmul_dtype)
    for r, a in w_entries:
        w_slab = w_slab.at[r:r + a.shape[0], :a.shape[1]].set(a.astype(matmul_dtype))
    b_slab = jnp.zeros((_round_up(brow, 8), bcols), jnp.float32)
    for r, a in b_entries:
        b_slab = b_slab.at[r:r + 1, :a.shape[1]].set(a.astype(jnp.float32))
    return w_slab, b_slab, tuple(layout)


def _gvp_stack_cost(layout, rows):
    """Rough flop / transcendental count of a GVP stack applied to `rows` rows."""
    flops, trans = 0, 0
    for lay in layout:
        _, vi, h = lay["wh"]
        _, si, so = lay["ws_s"]
        _, _, vo = lay["wv"]
        flops += 2 * rows * (3 * vi * h + si * so + h * so + 3 * h * vo + so * vo)
        trans += rows * (2 * so + vo)
    return int(flops), int(trans)


# -----------------------------------------------------------------------------
# in-kernel math (traced inside Pallas kernels; all values are 2-D [T, C])
# -----------------------------------------------------------------------------
def _gvp_compute(s, vx, vy, vz, w_ref, b_ref, lay, scalar_act, vector_act):
    """Geometric Vector Perceptron (vector_gate=True), x/y/z-decomposed vectors.

    Weights come from a pre-packed slab (8-aligned static slices); matmul inputs
    are cast to the slab dtype (f32 or bf16) with f32 accumulation.
    """
    mm = w_ref.dtype

    def wmat(name):
        r, nr, nc = lay[name]
        return w_ref[r:r + nr, :nc]

    def bias(name):
        r, _, nc = lay[name]
        return b_ref[r:r + 1, :nc]

    t = s.shape[0]
    v_all = jnp.concatenate([vx, vy, vz], axis=0).astype(mm)           # [3T, vi]
    vh_all = jnp.dot(v_all, wmat("wh"), preferred_element_type=jnp.float32)
    vhx, vhy, vhz = vh_all[:t], vh_all[t:2 * t], vh_all[2 * t:]
    vn = jnp.sqrt(jnp.maximum(vhx * vhx + vhy * vhy + vhz * vhz, EPS_NORM))
    s_out = (jnp.dot(s.astype(mm), wmat("ws_s"), preferred_element_type=jnp.float32)
             + jnp.dot(vn.astype(mm), wmat("ws_v"), preferred_element_type=jnp.float32)
             + bias("bs"))
    vo_all = jnp.dot(vh_all.astype(mm), wmat("wv"),
                     preferred_element_type=jnp.float32)               # [3T, vo]
    gate_in = jax.nn.sigmoid(s_out) if vector_act else s_out
    gate = jax.nn.sigmoid(
        jnp.dot(gate_in.astype(mm), wmat("wsv"), preferred_element_type=jnp.float32)
        + bias("bsv"))
    vox = vo_all[:t] * gate
    voy = vo_all[t:2 * t] * gate
    voz = vo_all[2 * t:] * gate
    if scalar_act:
        s_out = jnp.maximum(s_out, 0.0)
    return s_out, vox, voy, voz


def _layernorm_compute(s, vx, vy, vz, gamma, beta):
    """Combined LayerNorm for (s, V) tuples (rsqrt-multiply -> EUP slot)."""
    mu = jnp.mean(s, axis=-1, keepdims=True)
    var = jnp.mean(jnp.square(s - mu), axis=-1, keepdims=True)
    s_out = (s - mu) * jax.lax.rsqrt(var + EPS_LN) * gamma + beta
    sq = jnp.maximum(vx * vx + vy * vy + vz * vz, EPS_NORM)
    inv_vn = jax.lax.rsqrt(jnp.mean(sq, axis=-1, keepdims=True))
    return s_out, vx * inv_vn, vy * inv_vn, vz * inv_vn


def _pack_lanes(s, vx, vy, vz, c_out):
    """Pack (s, vx, vy, vz) into one lane-dense [T, c_out] slab (zero lane pad)."""
    parts = [s, vx, vy, vz]
    used = s.shape[1] + 3 * vx.shape[1]
    if c_out > used:
        parts.append(jnp.zeros((s.shape[0], c_out - used), jnp.float32))
    return jnp.concatenate(parts, axis=-1)


# -----------------------------------------------------------------------------
# Pallas kernels
# -----------------------------------------------------------------------------
def _message_kernel(layout, acts, si, vi, tile_n, c_out,
                    dst_ref, msg_in_ref, inv_deg_ref, w_ref, b_ref, out_ref):
    """GVP message stack on an edge tile + node-tiled one-hot mean aggregation."""
    k = pl.program_id(1)                                   # edge-tile (reduction) axis

    @pl.when(k == 0)
    def _():
        out_ref[...] = jnp.zeros_like(out_ref)

    x = msg_in_ref[...]                                    # [TE, c_in] packed
    s = x[:, :si]
    vx = x[:, si:si + vi]
    vy = x[:, si + vi:si + 2 * vi]
    vz = x[:, si + 2 * vi:si + 3 * vi]
    for lay, (sa, va) in zip(layout, acts):
        s, vx, vy, vz = _gvp_compute(s, vx, vy, vz, w_ref, b_ref, lay, sa, va)

    packed = _pack_lanes(s, vx, vy, vz, c_out)             # [TE, c_out]

    # one-hot only against the node ids of the CURRENT node tile
    node_base = pl.program_id(0) * tile_n
    dst = dst_ref[...]                                     # [1, TE], -1 = padded edge
    rows = node_base + jax.lax.broadcasted_iota(
        jnp.int32, (tile_n, packed.shape[0]), 0)
    onehot = (rows == dst).astype(jnp.float32)             # [TN, TE]
    out_ref[...] += jnp.dot(onehot, packed, preferred_element_type=jnp.float32)

    @pl.when(k == pl.num_programs(1) - 1)
    def _():
        out_ref[...] = out_ref[...] * inv_deg_ref[...]     # 'mean' aggregation


def _node_kernel(layout, acts, ns, nv, c_out,
                 x_ref, dh_ref, ln_ref, w_ref, b_ref, out_ref):
    """Residual + LayerNorm + feedforward GVP stack + residual + LayerNorm."""
    # residual 1 (dropout == identity in eval mode) as a single packed add
    h = x_ref[...] + dh_ref[...]                           # [TN, c_out] packed
    s = h[:, :ns]
    vx = h[:, ns:ns + nv]
    vy = h[:, ns + nv:ns + 2 * nv]
    vz = h[:, ns + 2 * nv:ns + 3 * nv]
    s, vx, vy, vz = _layernorm_compute(s, vx, vy, vz,
                                       ln_ref[0:1, :], ln_ref[8:9, :])

    # pointwise feedforward GVP stack
    fs, fvx, fvy, fvz = s, vx, vy, vz
    for lay, (sa, va) in zip(layout, acts):
        fs, fvx, fvy, fvz = _gvp_compute(fs, fvx, fvy, fvz, w_ref, b_ref, lay, sa, va)

    # residual 2 + LayerNorm[1], single lane-dense 128-wide store
    s2, vx2, vy2, vz2 = _layernorm_compute(
        s + fs, vx + fvx, vy + fvy, vz + fvz, ln_ref[16:17, :], ln_ref[24:25, :])
    out_ref[...] = _pack_lanes(s2, vx2, vy2, vz2, c_out)


# -----------------------------------------------------------------------------
# pallas_call wrappers
# -----------------------------------------------------------------------------
def gvp_message_pass(dst_p, msg_in, inv_deg, w_slab, b_slab, layout, acts,
                     si_msg, vi_msg, c_out, tile_n, tile_e, vmem_limit):
    e_pad, c_in = msg_in.shape
    n_pad = inv_deg.shape[0]
    n_tiles_n = n_pad // tile_n
    n_tiles_e = e_pad // tile_e

    kernel = functools.partial(_message_kernel, layout, tuple(acts),
                               si_msg, vi_msg, tile_n, c_out)

    gvp_flops, gvp_trans = _gvp_stack_cost(layout, e_pad)
    cost = pl.CostEstimate(
        flops=int(n_tiles_n * gvp_flops + 2 * n_pad * e_pad * c_out),
        transcendentals=int(n_tiles_n * gvp_trans),
        bytes_accessed=int(n_tiles_n * (msg_in.size * 4 + dst_p.size * 4)
                           + inv_deg.size * 4
                           + w_slab.size * w_slab.dtype.itemsize
                           + b_slab.size * 4 + n_pad * c_out * 4))

    return pl.pallas_call(
        kernel,
        out_shape=jax.ShapeDtypeStruct((n_pad, c_out), jnp.float32),
        grid=(n_tiles_n, n_tiles_e),
        in_specs=[
            pl.BlockSpec((1, tile_e), lambda i, k: (0, k)),
            pl.BlockSpec((tile_e, c_in), lambda i, k: (k, 0)),
            pl.BlockSpec((tile_n, 1), lambda i, k: (i, 0)),
            pl.BlockSpec(w_slab.shape, lambda i, k: (0, 0)),
            pl.BlockSpec(b_slab.shape, lambda i, k: (0, 0)),
        ],
        out_specs=pl.BlockSpec((tile_n, c_out), lambda i, k: (i, 0)),
        compiler_params=pltpu.CompilerParams(
            dimension_semantics=("parallel", "arbitrary"),
            vmem_limit_bytes=vmem_limit),
        cost_estimate=cost,
    )(dst_p, msg_in, inv_deg, w_slab, b_slab)


def gvp_node_update(x_in, dh, ln_slab, w_slab, b_slab, layout, acts,
                    ns, nv, c_out, tile_n, vmem_limit):
    n_pad = x_in.shape[0]
    n_tiles = n_pad // tile_n

    kernel = functools.partial(_node_kernel, layout, tuple(acts), ns, nv, c_out)

    gvp_flops, gvp_trans = _gvp_stack_cost(layout, n_pad)
    cost = pl.CostEstimate(
        flops=int(gvp_flops + 20 * n_pad * c_out),
        transcendentals=int(gvp_trans + 4 * n_pad),
        bytes_accessed=int(3 * n_pad * c_out * 4
                           + w_slab.size * w_slab.dtype.itemsize
                           + b_slab.size * 4 + ln_slab.size * 4))

    return pl.pallas_call(
        kernel,
        out_shape=jax.ShapeDtypeStruct((n_pad, c_out), jnp.float32),
        grid=(n_tiles,),
        in_specs=[
            pl.BlockSpec((tile_n, c_out), lambda i: (i, 0)),
            pl.BlockSpec((tile_n, c_out), lambda i: (i, 0)),
            pl.BlockSpec(ln_slab.shape, lambda i: (0, 0)),
            pl.BlockSpec(w_slab.shape, lambda i: (0, 0)),
            pl.BlockSpec(b_slab.shape, lambda i: (0, 0)),
        ],
        out_specs=pl.BlockSpec((tile_n, c_out), lambda i: (i, 0)),
        compiler_params=pltpu.CompilerParams(
            dimension_semantics=("parallel",),
            vmem_limit_bytes=vmem_limit),
        cost_estimate=cost,
    )(x_in, dh, ln_slab, w_slab, b_slab)


def gvp_conv_layer_forward(params, x_s, x_v, edge_index, edge_s, edge_v,
                           tile_e=1024, tile_n=256, matmul_dtype=jnp.float32):
    """Full GVPConvLayer forward (residual=True, node_mask=None, eval mode)."""
    n_nodes, ns = x_s.shape
    nv = x_v.shape[1]
    n_edges, es = edge_s.shape
    ev = edge_v.shape[1]
    src, dst = edge_index[0], edge_index[1]   # PyG: row 0 = source j, row 1 = target i

    si_msg = 2 * ns + es
    vi_msg = 2 * nv + ev
    c_in = _round_up(si_msg + 3 * vi_msg, 128)   # packed edge-input lane width
    c_out = _round_up(ns + 3 * nv, 128)          # packed node lane width

    # row tiling: second-to-last block dims must be multiples of 8; the dst row
    # (last dim = tile_e) must be a multiple of 128 unless one tile covers all edges.
    if n_edges <= tile_e:
        tile_e = _round_up(max(n_edges, 1), 8)
        e_pad = tile_e
    else:
        tile_e = _round_up(tile_e, 128)
        e_pad = _round_up(n_edges, tile_e)
    if n_nodes <= tile_n:
        tile_n = _round_up(max(n_nodes, 1), 8)
        n_pad = tile_n
    else:
        tile_n = _round_up(tile_n, 8)
        n_pad = _round_up(n_nodes, tile_n)

    # spatial-3 axis to the front: [rows, C, 3] -> [3, rows, C]
    xv3 = jnp.transpose(x_v, (2, 0, 1))
    ev3 = jnp.transpose(edge_v, (2, 0, 1))

    # ONE lane-dense packed edge-input slab: [ s_j|edge_s|s_i | vx | vy | vz | 0pad ]
    msg_s = jnp.concatenate([x_s[src], edge_s, x_s[dst]], axis=-1)
    msg_vx = jnp.concatenate([xv3[0][src], ev3[0], xv3[0][dst]], axis=-1)
    msg_vy = jnp.concatenate([xv3[1][src], ev3[1], xv3[1][dst]], axis=-1)
    msg_vz = jnp.concatenate([xv3[2][src], ev3[2], xv3[2][dst]], axis=-1)
    msg_in = jnp.concatenate([msg_s, msg_vx, msg_vy, msg_vz], axis=-1)
    msg_in = jnp.pad(msg_in, ((0, e_pad - n_edges), (0, c_in - msg_in.shape[1])))

    dst_p = jnp.pad(dst.astype(jnp.int32), (0, e_pad - n_edges),
                    constant_values=-1)[None, :]           # padded edges match no node

    # O(N) 'mean' aggregation normalizer (no dense N x E adjacency anywhere)
    deg = jnp.zeros((n_pad,), jnp.float32).at[dst].add(1.0)
    inv_deg = (1.0 / jnp.maximum(deg, 1.0))[:, None]       # [N_pad, 1]

    # consolidated weight slabs (matmul dtype) + f32 bias slabs + LN slab
    wm, bm, lay_m = _pack_gvp_weights(params["msg"], matmul_dtype)
    wf, bf, lay_f = _pack_gvp_weights(params["ff"], matmul_dtype)
    ln_slab = jnp.zeros((32, ns), jnp.float32)
    ln_slab = ln_slab.at[0].set(params["ln0_g"][0])
    ln_slab = ln_slab.at[8].set(params["ln0_b"][0])
    ln_slab = ln_slab.at[16].set(params["ln1_g"][0])
    ln_slab = ln_slab.at[24].set(params["ln1_b"][0])

    vmem_limit = _vmem_limit_bytes()

    dh = gvp_message_pass(dst_p, msg_in, inv_deg, wm, bm, lay_m, MSG_ACTS,
                          si_msg, vi_msg, c_out, tile_n, tile_e, vmem_limit)

    # packed node-feature slab with the SAME layout as dh -> packed residual add
    x_in = jnp.concatenate([x_s, xv3[0], xv3[1], xv3[2]], axis=-1)
    x_in = jnp.pad(x_in, ((0, n_pad - n_nodes), (0, c_out - x_in.shape[1])))

    out = gvp_node_update(x_in, dh, ln_slab, wf, bf, lay_f, FF_ACTS,
                          ns, nv, c_out, tile_n, vmem_limit)

    out_s = out[:n_nodes, :ns]
    out_v = jnp.transpose(out[:n_nodes, ns:ns + 3 * nv].reshape(n_nodes, 3, nv),
                          (0, 2, 1))
    return out_s, out_v


# -----------------------------------------------------------------------------
# deterministic parameter init (weights stored pre-transposed as [in, out];
# ws is stored pre-split into ws_s [si, so] and ws_v [h, so])
# -----------------------------------------------------------------------------
def _init_gvp_params(key, in_dims, out_dims):
    si, vi = in_dims
    so, vo = out_dims
    h = max(vi, vo)
    k = jax.random.split(key, 7)
    sc = lambda fan: 1.0 / jnp.sqrt(jnp.float32(fan))
    return dict(
        wh=jax.random.normal(k[0], (vi, h), jnp.float32) * sc(vi),
        ws_s=jax.random.normal(k[1], (si, so), jnp.float32) * sc(h + si),
        ws_v=jax.random.normal(k[2], (h, so), jnp.float32) * sc(h + si),
        bs=jax.random.normal(k[3], (1, so), jnp.float32) * 0.1,
        wv=jax.random.normal(k[4], (h, vo), jnp.float32) * sc(h),
        wsv=jax.random.normal(k[5], (so, vo), jnp.float32) * sc(so),
        bsv=jax.random.normal(k[6], (1, vo), jnp.float32) * 0.1,
    )


# -----------------------------------------------------------------------------
# pure-JAX reference (PyTorch [rows, C, 3] layout) for a correctness check
# -----------------------------------------------------------------------------
def _gvp_ref(s, v, w, sa, va):
    vt = jnp.swapaxes(v, -1, -2)                                   # [M, 3, C]
    vh = jnp.einsum("mic,ch->mih", vt, w["wh"])
    vn = jnp.sqrt(jnp.maximum(jnp.sum(vh * vh, axis=-2), EPS_NORM))
    s_out = s @ w["ws_s"] + vn @ w["ws_v"] + w["bs"]
    vo = jnp.einsum("mih,ho->mio", vh, w["wv"])
    vo = jnp.swapaxes(vo, -1, -2)                                  # [M, vo, 3]
    gate_in = jax.nn.sigmoid(s_out) if va else s_out
    gate = jax.nn.sigmoid(gate_in @ w["wsv"] + w["bsv"])
    vo = vo * gate[..., None]
    if sa:
        s_out = jnp.maximum(s_out, 0.0)
    return s_out, vo


def _layernorm_ref(s, v, gamma, beta):
    mu = jnp.mean(s, -1, keepdims=True)
    var = jnp.mean((s - mu) ** 2, -1, keepdims=True)
    s_out = (s - mu) / jnp.sqrt(var + EPS_LN) * gamma + beta
    vn = jnp.maximum(jnp.sum(v * v, axis=-1, keepdims=True), EPS_NORM)
    vn = jnp.sqrt(jnp.mean(vn, axis=-2, keepdims=True))
    return s_out, v / vn


def reference_forward(params, x_s, x_v, edge_index, edge_s, edge_v):
    src, dst = edge_index[0], edge_index[1]
    n_nodes = x_s.shape[0]
    ms = jnp.concatenate([x_s[src], edge_s, x_s[dst]], -1)
    mv = jnp.concatenate([x_v[src], edge_v, x_v[dst]], -2)
    for w, (sa, va) in zip(params["msg"], MSG_ACTS):
        ms, mv = _gvp_ref(ms, mv, w, sa, va)
    one_hot = (dst[None, :] == jnp.arange(n_nodes)[:, None]).astype(jnp.float32)
    adj = one_hot / jnp.maximum(jnp.sum(one_hot, 1, keepdims=True), 1.0)
    dh_s = adj @ ms
    dh_v = jnp.einsum("ne,ecd->ncd", adj, mv)
    s, v = _layernorm_ref(x_s + dh_s, x_v + dh_v, params["ln0_g"], params["ln0_b"])
    fs, fv = s, v
    for w, (sa, va) in zip(params["ff"], FF_ACTS):
        fs, fv = _gvp_ref(fs, fv, w, sa, va)
    return _layernorm_ref(s + fs, v + fv, params["ln1_g"], params["ln1_b"])


# -----------------------------------------------------------------------------
def _make_example(key, n_nodes, n_edges, ns, nv, es, ev):
    k = jax.random.split(key, 16)
    x_s = jax.random.normal(k[0], (n_nodes, ns), jnp.float32)
    x_v = jax.random.normal(k[1], (n_nodes, nv, 3), jnp.float32)
    edge_s = jax.random.normal(k[2], (n_edges, es), jnp.float32)
    edge_v = jax.random.normal(k[3], (n_edges, ev, 3), jnp.float32)
    src = jax.random.randint(k[4], (n_edges,), 0, n_nodes)
    dst = jax.random.randint(k[5], (n_edges,), 0, n_nodes)
    edge_index = jnp.stack([src, dst], axis=0)
    params = dict(
        msg=[
            _init_gvp_params(k[6], (2 * ns + es, 2 * nv + ev), (ns, nv)),
            _init_gvp_params(k[7], (ns, nv), (ns, nv)),
            _init_gvp_params(k[8], (ns, nv), (ns, nv)),
        ],
        ff=[
            _init_gvp_params(k[9], (ns, nv), (4 * ns, 2 * nv)),
            _init_gvp_params(k[10], (4 * ns, 2 * nv), (ns, nv)),
        ],
        ln0_g=1.0 + 0.1 * jax.random.normal(k[11], (1, ns), jnp.float32),
        ln0_b=0.1 * jax.random.normal(k[12], (1, ns), jnp.float32),
        ln1_g=1.0 + 0.1 * jax.random.normal(k[13], (1, ns), jnp.float32),
        ln1_b=0.1 * jax.random.normal(k[14], (1, ns), jnp.float32),
    )
    return params, x_s, x_v, edge_index, edge_s, edge_v


if __name__ == "__main__":
    # node_dims = (16, 4), edge_dims = (8, 2), n_message=3, n_feedforward=2
    ns, nv, es, ev = 16, 4, 8, 2
    key0, key1 = jax.random.split(jax.random.PRNGKey(0))

    # case 1: tiny graph -> single node tile / single edge tile
    p1, xs1, xv1, ei1, es1, ev1 = _make_example(key0, 8, 16, ns, nv, es, ev)
    out_s, out_v = gvp_conv_layer_forward(p1, xs1, xv1, ei1, es1, ev1)
    jax.block_until_ready((out_s, out_v))
    ref_s, ref_v = reference_forward(p1, xs1, xv1, ei1, es1, ev1)
    assert out_s.shape == (8, ns) and out_v.shape == (8, nv, 3)
    assert jnp.allclose(out_s, ref_s, rtol=2e-3, atol=2e-3)
    assert jnp.allclose(out_v, ref_v, rtol=2e-3, atol=2e-3)

    # case 2: multi-tile path (node-tiled x edge-tiled aggregation grid)
    p2, xs2, xv2, ei2, es2, ev2 = _make_example(key1, 40, 300, ns, nv, es, ev)
    out_s2, out_v2 = gvp_conv_layer_forward(p2, xs2, xv2, ei2, es2, ev2,
                                            tile_e=128, tile_n=16)
    jax.block_until_ready((out_s2, out_v2))
    ref_s2, ref_v2 = reference_forward(p2, xs2, xv2, ei2, es2, ev2)
    assert jnp.allclose(out_s2, ref_s2, rtol=2e-3, atol=2e-3)
    assert jnp.allclose(out_v2, ref_v2, rtol=2e-3, atol=2e-3)

    # case 3: bf16 matmul-input fast path (v6e/v7x MXU rate); loose smoke check
    bf_s, bf_v = gvp_conv_layer_forward(p1, xs1, xv1, ei1, es1, ev1,
                                        matmul_dtype=jnp.bfloat16)
    jax.block_until_ready((bf_s, bf_v))
    assert bool(jnp.all(jnp.isfinite(bf_s))) and bool(jnp.all(jnp.isfinite(bf_v)))
    assert jnp.allclose(bf_s, out_s, rtol=0.1, atol=0.2)
    assert jnp.allclose(bf_v, out_v, rtol=0.1, atol=0.2)

    print("KERNEL_OK")
</pallas_src>

<mosaic_0001>
module attributes {stable_mosaic.version = 11 : i64} {
  func.func @_message_kernel(%arg0: i32, %arg1: i32, %arg2: memref<1x16xi32, #tpu.memory_space<vmem>>, %arg3: memref<16x128xf32, #tpu.memory_space<vmem>>, %arg4: memref<8x1xf32, #tpu.memory_space<vmem>>, %arg5: memref<216x16xf32, #tpu.memory_space<vmem>>, %arg6: memref<48x16xf32, #tpu.memory_space<vmem>>, %arg7: memref<8x128xf32, #tpu.memory_space<vmem>>) attributes {dimension_semantics = [#tpu.dimension_semantics<parallel>, #tpu.dimension_semantics<arbitrary>], iteration_bounds = array<i64: 1, 1>, scalar_prefetch = 0 : i64, scratch_operands = 0 : i64, tpu.core_type = #tpu.core_type<tc>, window_params = [{transform_indices = @transform_0, window_bounds = array<i64: 1, 16>}, {transform_indices = @transform_1, window_bounds = array<i64: 16, 128>}, {transform_indices = @transform_2, window_bounds = array<i64: 8, 1>}, {pipeline_mode = #tpu.pipeline_mode<synchronous>, transform_indices = @transform_3, window_bounds = array<i64: 216, 16>}, {pipeline_mode = #tpu.pipeline_mode<synchronous>, transform_indices = @transform_4, window_bounds = array<i64: 48, 16>}, {transform_indices = @transform_5, window_bounds = array<i64: 8, 128>}]} {
    %c0_i32 = arith.constant 0 : i32
    %0 = arith.cmpi eq, %arg1, %c0_i32 : i32
    %1 = arith.extui %0 : i1 to i32
    %c0_i32_0 = arith.constant 0 : i32
    %2 = arith.cmpi ne, %1, %c0_i32_0 : i32
    scf.if %2 {
      %cst_60 = arith.constant 0.000000e+00 : f32
      %160 = vector.broadcast %cst_60 : f32 to vector<8x128xf32>
      %c0_61 = arith.constant 0 : index
      %c0_62 = arith.constant 0 : index
      %161 = vector.load %arg7[%c0_61, %c0_62] : memref<8x128xf32, #tpu.memory_space<vmem>>, vector<8x128xf32>
      tpu.vector_store %arg7[%c0_61, %c0_62], %160 {strides = array<i32>} : memref<8x128xf32, #tpu.memory_space<vmem>>, vector<8x128xf32>,
    } else {
    }
    %c0 = arith.constant 0 : index
    %c0_1 = arith.constant 0 : index
    %3 = vector.load %arg3[%c0, %c0_1] : memref<16x128xf32, #tpu.memory_space<vmem>>, vector<16x128xf32>
    %4 = vector.extract_strided_slice %3 {offsets = [0, 0], sizes = [16, 40], strides = [1, 1]} : vector<16x128xf32> to vector<16x40xf32>
    %5 = vector.extract_strided_slice %3 {offsets = [0, 40], sizes = [16, 10], strides = [1, 1]} : vector<16x128xf32> to vector<16x10xf32>
    %6 = vector.extract_strided_slice %3 {offsets = [0, 50], sizes = [16, 10], strides = [1, 1]} : vector<16x128xf32> to vector<16x10xf32>
    %7 = vector.extract_strided_slice %3 {offsets = [0, 60], sizes = [16, 10], strides = [1, 1]} : vector<16x128xf32> to vector<16x10xf32>
    %8 = tpu.concatenate %5, %6, %7 in 0 : vector<16x10xf32>, vector<16x10xf32>, vector<16x10xf32> -> vector<48x10xf32>
    %c0_2 = arith.constant 0 : index
    %c0_3 = arith.constant 0 : index
    %9 = vector.load %arg5[%c0_2, %c0_3] : memref<216x16xf32, #tpu.memory_space<vmem>>, vector<10x10xf32>
    %cst = arith.constant dense<0.000000e+00> : vector<48x10xf32>
    %10 = tpu.matmul %8, %9, %cst {dimension_numbers = #tpu.dot_dimension_numbers<[1], [0], [0], [1], [0, 0, 1, 1], [], []>} : vector<48x10xf32>, vector<10x10xf32>, vector<48x10xf32> -> vector<48x10xf32>
    %11 = vector.extract_strided_slice %10 {offsets = [0, 0], sizes = [16, 10], strides = [1, 1]} : vector<48x10xf32> to vector<16x10xf32>
    %12 = vector.extract_strided_slice %10 {offsets = [16, 0], sizes = [16, 10], strides = [1, 1]} : vector<48x10xf32> to vector<16x10xf32>
    %13 = vector.extract_strided_slice %10 {offsets = [32, 0], sizes = [16, 10], strides = [1, 1]} : vector<48x10xf32> to vector<16x10xf32>
    %14 = arith.mulf %11, %11 : vector<16x10xf32>
    %15 = arith.mulf %12, %12 : vector<16x10xf32>
    %16 = arith.addf %14, %15 : vector<16x10xf32>
    %17 = arith.mulf %13, %13 : vector<16x10xf32>
    %18 = arith.addf %16, %17 : vector<16x10xf32>
    %cst_4 = arith.constant 9.99999993E-9 : f32
    %19 = vector.broadcast %cst_4 : f32 to vector<16x10xf32>
    %20 = arith.maximumf %18, %19 : vector<16x10xf32>
    %21 = math.sqrt %20 : vector<16x10xf32>
    %c16 = arith.constant 16 : index
    %c0_5 = arith.constant 0 : index
    %22 = vector.load %arg5[%c16, %c0_5] : memref<216x16xf32, #tpu.memory_space<vmem>>, vector<40x16xf32>
    %cst_6 = arith.constant dense<0.000000e+00> : vector<16x16xf32>
    %23 = tpu.matmul %4, %22, %cst_6 {dimension_numbers = #tpu.dot_dimension_numbers<[1], [0], [0], [1], [0, 0, 1, 1], [], []>} : vector<16x40xf32>, vector<40x16xf32>, vector<16x16xf32> -> vector<16x16xf32>
    %c56 = arith.constant 56 : index
    %c0_7 = arith.constant 0 : index
    %24 = vector.load %arg5[%c56, %c0_7] : memref<216x16xf32, #tpu.memory_space<vmem>>, vector<10x16xf32>
    %cst_8 = arith.constant dense<0.000000e+00> : vector<16x16xf32>
    %25 = tpu.matmul %21, %24, %cst_8 {dimension_numbers = #tpu.dot_dimension_numbers<[1], [0], [0], [1], [0, 0, 1, 1], [], []>} : vector<16x10xf32>, vector<10x16xf32>, vector<16x16xf32> -> vector<16x16xf32>
    %26 = arith.addf %23, %25 : vector<16x16xf32>
    %c0_9 = arith.constant 0 : index
    %c0_10 = arith.constant 0 : index
    %27 = vector.load %arg6[%c0_9, %c0_10] : memref<48x16xf32, #tpu.memory_space<vmem>>, vector<1x16xf32>
    %28 = vector.broadcast %27 : vector<1x16xf32> to vector<16x16xf32>
    %29 = arith.addf %26, %28 : vector<16x16xf32>
    %c72 = arith.constant 72 : index
    %c0_11 = arith.constant 0 : index
    %30 = vector.load %arg5[%c72, %c0_11] : memref<216x16xf32, #tpu.memory_space<vmem>>, vector<10x4xf32>
    %cst_12 = arith.constant dense<0.000000e+00> : vector<48x4xf32>
    %31 = tpu.matmul %10, %30, %cst_12 {dimension_numbers = #tpu.dot_dimension_numbers<[1], [0], [0], [1], [0, 0, 1, 1], [], []>} : vector<48x10xf32>, vector<10x4xf32>, vector<48x4xf32> -> vector<48x4xf32>
    %32 = arith.negf %29 : vector<16x16xf32>
    %33 = math.exp %32 : vector<16x16xf32>
    %cst_13 = arith.constant 1.000000e+00 : f32
    %34 = vector.broadcast %cst_13 : f32 to vector<16x16xf32>
    %35 = arith.addf %34, %33 : vector<16x16xf32>
    %36 = arith.divf %34, %35 : vector<16x16xf32>
    %c88 = arith.constant 88 : index
    %c0_14 = arith.constant 0 : index
    %37 = vector.load %arg5[%c88, %c0_14] : memref<216x16xf32, #tpu.memory_space<vmem>>, vector<16x4xf32>
    %cst_15 = arith.constant dense<0.000000e+00> : vector<16x4xf32>
    %38 = tpu.matmul %36, %37, %cst_15 {dimension_numbers = #tpu.dot_dimension_numbers<[1], [0], [0], [1], [0, 0, 1, 1], [], []>} : vector<16x16xf32>, vector<16x4xf32>, vector<16x4xf32> -> vector<16x4xf32>
    %c8 = arith.constant 8 : index
    %c0_16 = arith.constant 0 : index
    %39 = vector.load %arg6[%c8, %c0_16] : memref<48x16xf32, #tpu.memory_space<vmem>>, vector<1x4xf32>
    %40 = vector.broadcast %39 : vector<1x4xf32> to vector<16x4xf32>
    %41 = arith.addf %38, %40 : vector<16x4xf32>
    %42 = arith.negf %41 : vector<16x4xf32>
    %43 = math.exp %42 : vector<16x4xf32>
    %cst_17 = arith.constant 1.000000e+00 : f32
    %44 = vector.broadcast %cst_17 : f32 to vector<16x4xf32>
    %45 = arith.addf %44, %43 : vector<16x4xf32>
    %46 = arith.divf %44, %45 : vector<16x4xf32>
    %47 = vector.extract_strided_slice %31 {offsets = [0, 0], sizes = [16, 4], strides = [1, 1]} : vector<48x4xf32> to vector<16x4xf32>
    %48 = arith.mulf %47, %46 : vector<16x4xf32>
    %49 = vector.extract_strided_slice %31 {offsets = [16, 0], sizes = [16, 4], strides = [1, 1]} : vector<48x4xf32> to vector<16x4xf32>
    %50 = arith.mulf %49, %46 : vector<16x4xf32>
    %51 = vector.extract_strided_slice %31 {offsets = [32, 0], sizes = [16, 4], strides = [1, 1]} : vector<48x4xf32> to vector<16x4xf32>
    %52 = arith.mulf %51, %46 : vector<16x4xf32>
    %cst_18 = arith.constant 0.000000e+00 : f32
    %53 = vector.broadcast %cst_18 : f32 to vector<16x16xf32>
    %54 = arith.maximumf %29, %53 : vector<16x16xf32>
    %55 = tpu.concatenate %48, %50, %52 in 0 : vector<16x4xf32>, vector<16x4xf32>, vector<16x4xf32> -> vector<48x4xf32>
    %c104 = arith.constant 104 : index
    %c0_19 = arith.constant 0 : index
    %56 = vector.load %arg5[%c104, %c0_19] : memref<216x16xf32, #tpu.memory_space<vmem>>, vector<4x4xf32>
    %cst_20 = arith.constant dense<0.000000e+00> : vector<48x4xf32>
    %57 = tpu.matmul %55, %56, %cst_20 {dimension_numbers = #tpu.dot_dimension_numbers<[1], [0], [0], [1], [0, 0, 1, 1], [], []>} : vector<48x4xf32>, vector<4x4xf32>, vector<48x4xf32> -> vector<48x4xf32>
    %58 = vector.extract_strided_slice %57 {offsets = [0, 0], sizes = [16, 4], strides = [1, 1]} : vector<48x4xf32> to vector<16x4xf32>
    %59 = vector.extract_strided_slice %57 {offsets = [16, 0], sizes = [16, 4], strides = [1, 1]} : vector<48x4xf32> to vector<16x4xf32>
    %60 = vector.extract_strided_slice %57 {offsets = [32, 0], sizes = [16, 4], strides = [1, 1]} : vector<48x4xf32> to vector<16x4xf32>
    %61 = arith.mulf %58, %58 : vector<16x4xf32>
    %62 = arith.mulf %59, %59 : vector<16x4xf32>
    %63 = arith.addf %61, %62 : vector<16x4xf32>
    %64 = arith.mulf %60, %60 : vector<16x4xf32>
    %65 = arith.addf %63, %64 : vector<16x4xf32>
    %cst_21 = arith.constant 9.99999993E-9 : f32
    %66 = vector.broadcast %cst_21 : f32 to vector<16x4xf32>
    %67 = arith.maximumf %65, %66 : vector<16x4xf32>
    %68 = math.sqrt %67 : vector<16x4xf32>
    %c112 = arith.constant 112 : index
    %c0_22 = arith.constant 0 : index
    %69 = vector.load %arg5[%c112, %c0_22] : memref<216x16xf32, #tpu.memory_space<vmem>>, vector<16x16xf32>
    %cst_23 = arith.constant dense<0.000000e+00> : vector<16x16xf32>
    %70 = tpu.matmul %54, %69, %cst_23 {dimension_numbers = #tpu.dot_dimension_numbers<[1], [0], [0], [1], [0, 0, 1, 1], [], []>} : vector<16x16xf32>, vector<16x16xf32>, vector<16x16xf32> -> vector<16x16xf32>
    %c128 = arith.constant 128 : index
    %c0_24 = arith.constant 0 : index
    %71 = vector.load %arg5[%c128, %c0_24] : memref<216x16xf32, #tpu.memory_space<vmem>>, vector<4x16xf32>
    %cst_25 = arith.constant dense<0.000000e+00> : vector<16x16xf32>
    %72 = tpu.matmul %68, %71, %cst_25 {dimension_numbers = #tpu.dot_dimension_numbers<[1], [0], [0], [1], [0, 0, 1, 1], [], []>} : vector<16x4xf32>, vector<4x16xf32>, vector<16x16xf32> -> vector<16x16xf32>
    %73 = arith.addf %70, %72 : vector<16x16xf32>
    %c16_26 = arith.constant 16 : index
    %c0_27 = arith.constant 0 : index
    %74 = vector.load %arg6[%c16_26, %c0_27] : memref<48x16xf32, #tpu.memory_space<vmem>>, vector<1x16xf32>
    %75 = vector.broadcast %74 : vector<1x16xf32> to vector<16x16xf32>
    %76 = arith.addf %73, %75 : vector<16x16xf32>
    %c136 = arith.constant 136 : index
    %c0_28 = arith.constant 0 : index
    %77 = vector.load %arg5[%c136, %c0_28] : memref<216x16xf32, #tpu.memory_space<vmem>>, vector<4x4xf32>
    %cst_29 = arith.constant dense<0.000000e+00> : vector<48x4xf32>
    %78 = tpu.matmul %57, %77, %cst_29 {dimension_numbers = #tpu.dot_dimension_numbers<[1], [0], [0], [1], [0, 0, 1, 1], [], []>} : vector<48x4xf32>, vector<4x4xf32>, vector<48x4xf32> -> vector<48x4xf32>
    %79 = arith.negf %76 : vector<16x16xf32>
    %80 = math.exp %79 : vector<16x16xf32>
    %cst_30 = arith.constant 1.000000e+00 : f32
    %81 = vector.broadcast %cst_30 : f32 to vector<16x16xf32>
    %82 = arith.addf %81, %80 : vector<16x16xf32>
    %83 = arith.divf %81, %82 : vector<16x16xf32>
    %c144 = arith.constant 144 : index
    %c0_31 = arith.constant 0 : index
    %84 = vector.load %arg5[%c144, %c0_31] : memref<216x16xf32, #tpu.memory_space<vmem>>, vector<16x4xf32>
    %cst_32 = arith.constant dense<0.000000e+00> : vector<16x4xf32>
    %85 = tpu.matmul %83, %84, %cst_32 {dimension_numbers = #tpu.dot_dimension_numbers<[1], [0], [0], [1], [0, 0, 1, 1], [], []>} : vector<16x16xf32>, vector<16x4xf32>, vector<16x4xf32> -> vector<16x4xf32>
    %c24 = arith.constant 24 : index
    %c0_33 = arith.constant 0 : index
    %86 = vector.load %arg6[%c24, %c0_33] : memref<48x16xf32, #tpu.memory_space<vmem>>, vector<1x4xf32>
    %87 = vector.broadcast %86 : vector<1x4xf32> to vector<16x4xf32>
    %88 = arith.addf %85, %87 : vector<16x4xf32>
    %89 = arith.negf %88 : vector<16x4xf32>
    %90 = math.exp %89 : vector<16x4xf32>
    %cst_34 = arith.constant 1.000000e+00 : f32
    %91 = vector.broadcast %cst_34 : f32 to vector<16x4xf32>
    %92 = arith.addf %91, %90 : vector<16x4xf32>
    %93 = arith.divf %91, %92 : vector<16x4xf32>
    %94 = vector.extract_strided_slice %78 {offsets = [0, 0], sizes = [16, 4], strides = [1, 1]} : vector<48x4xf32> to vector<16x4xf32>
    %95 = arith.mulf %94, %93 : vector<16x4xf32>
    %96 = vector.extract_strided_slice %78 {offsets = [16, 0], sizes = [16, 4], strides = [1, 1]} : vector<48x4xf32> to vector<16x4xf32>
    %97 = arith.mulf %96, %93 : vector<16x4xf32>
    %98 = vector.extract_strided_slice %78 {offsets = [32, 0], sizes = [16, 4], strides = [1, 1]} : vector<48x4xf32> to vector<16x4xf32>
    %99 = arith.mulf %98, %93 : vector<16x4xf32>
    %cst_35 = arith.constant 0.000000e+00 : f32
    %100 = vector.broadcast %cst_35 : f32 to vector<16x16xf32>
    %101 = arith.maximumf %76, %100 : vector<16x16xf32>
    %102 = tpu.concatenate %95, %97, %99 in 0 : vector<16x4xf32>, vector<16x4xf32>, vector<16x4xf32> -> vector<48x4xf32>
    %c160 = arith.constant 160 : index
    %c0_36 = arith.constant 0 : index
    %103 = vector.load %arg5[%c160, %c0_36] : memref<216x16xf32, #tpu.memory_space<vmem>>, vector<4x4xf32>
    %cst_37 = arith.constant dense<0.000000e+00> : vector<48x4xf32>
    %104 = tpu.matmul %102, %103, %cst_37 {dimension_numbers = #tpu.dot_dimension_numbers<[1], [0], [0], [1], [0, 0, 1, 1], [], []>} : vector<48x4xf32>, vector<4x4xf32>, vector<48x4xf32> -> vector<48x4xf32>
    %105 = vector.extract_strided_slice %104 {offsets = [0, 0], sizes = [16, 4], strides = [1, 1]} : vector<48x4xf32> to vector<16x4xf32>
    %106 = vector.extract_strided_slice %104 {offsets = [16, 0], sizes = [16, 4], strides = [1, 1]} : vector<48x4xf32> to vector<16x4xf32>
    %107 = vector.extract_strided_slice %104 {offsets = [32, 0], sizes = [16, 4], strides = [1, 1]} : vector<48x4xf32> to vector<16x4xf32>
    %108 = arith.mulf %105, %105 : vector<16x4xf32>
    %109 = arith.mulf %106, %106 : vector<16x4xf32>
    %110 = arith.addf %108, %109 : vector<16x4xf32>
    %111 = arith.mulf %107, %107 : vector<16x4xf32>
    %112 = arith.addf %110, %111 : vector<16x4xf32>
    %cst_38 = arith.constant 9.99999993E-9 : f32
    %113 = vector.broadcast %cst_38 : f32 to vector<16x4xf32>
    %114 = arith.maximumf %112, %113 : vector<16x4xf32>
    %115 = math.sqrt %114 : vector<16x4xf32>
    %c168 = arith.constant 168 : index
    %c0_39 = arith.constant 0 : index
    %116 = vector.load %arg5[%c168, %c0_39] : memref<216x16xf32, #tpu.memory_space<vmem>>, vector<16x16xf32>
    %cst_40 = arith.constant dense<0.000000e+00> : vector<16x16xf32>
    %117 = tpu.matmul %101, %116, %cst_40 {dimension_numbers = #tpu.dot_dimension_numbers<[1], [0], [0], [1], [0, 0, 1, 1], [], []>} : vector<16x16xf32>, vector<16x16xf32>, vector<16x16xf32> -> vector<16x16xf32>
    %c184 = arith.constant 184 : index
    %c0_41 = arith.constant 0 : index
    %118 = vector.load %arg5[%c184, %c0_41] : memref<216x16xf32, #tpu.memory_space<vmem>>, vector<4x16xf32>
    %cst_42 = arith.constant dense<0.000000e+00> : vector<16x16xf32>
    %119 = tpu.matmul %115, %118, %cst_42 {dimension_numbers = #tpu.dot_dimension_numbers<[1], [0], [0], [1], [0, 0, 1, 1], [], []>} : vector<16x4xf32>, vector<4x16xf32>, vector<16x16xf32> -> vector<16x16xf32>
    %120 = arith.addf %117, %119 : vector<16x16xf32>
    %c32 = arith.constant 32 : index
    %c0_43 = arith.constant 0 : index
    %121 = vector.load %arg6[%c32, %c0_43] : memref<48x16xf32, #tpu.memory_space<vmem>>, vector<1x16xf32>
    %122 = vector.broadcast %121 : vector<1x16xf32> to vector<16x16xf32>
    %123 = arith.addf %120, %122 : vector<16x16xf32>
    %c192 = arith.constant 192 : index
    %c0_44 = arith.constant 0 : index
    %124 = vector.load %arg5[%c192, %c0_44] : memref<216x16xf32, #tpu.memory_space<vmem>>, vector<4x4xf32>
    %cst_45 = arith.constant dense<0.000000e+00> : vector<48x4xf32>
    %125 = tpu.matmul %104, %124, %cst_45 {dimension_numbers = #tpu.dot_dimension_numbers<[1], [0], [0], [1], [0, 0, 1, 1], [], []>} : vector<48x4xf32>, vector<4x4xf32>, vector<48x4xf32> -> vector<48x4xf32>
    %c200 = arith.constant 200 : index
    %c0_46 = arith.constant 0 : index
    %126 = vector.load %arg5[%c200, %c0_46] : memref<216x16xf32, #tpu.memory_space<vmem>>, vector<16x4xf32>
    %cst_47 = arith.constant dense<0.000000e+00> : vector<16x4xf32>
    %127 = tpu.matmul %123, %126, %cst_47 {dimension_numbers = #tpu.dot_dimension_numbers<[1], [0], [0], [1], [0, 0, 1, 1], [], []>} : vector<16x16xf32>, vector<16x4xf32>, vector<16x4xf32> -> vector<16x4xf32>
    %c40 = arith.constant 40 : index
    %c0_48 = arith.constant 0 : index
    %128 = vector.load %arg6[%c40, %c0_48] : memref<48x16xf32, #tpu.memory_space<vmem>>, vector<1x4xf32>
    %129 = vector.broadcast %128 : vector<1x4xf32> to vector<16x4xf32>
    %130 = arith.addf %127, %129 : vector<16x4xf32>
    %131 = arith.negf %130 : vector<16x4xf32>
    %132 = math.exp %131 : vector<16x4xf32>
    %cst_49 = arith.constant 1.000000e+00 : f32
    %133 = vector.broadcast %cst_49 : f32 to vector<16x4xf32>
    %134 = arith.addf %133, %132 : vector<16x4xf32>
    %135 = arith.divf %133, %134 : vector<16x4xf32>
    %136 = vector.extract_strided_slice %125 {offsets = [0, 0], sizes = [16, 4], strides = [1, 1]} : vector<48x4xf32> to vector<16x4xf32>
    %137 = arith.mulf %136, %135 : vector<16x4xf32>
    %138 = vector.extract_strided_slice %125 {offsets = [16, 0], sizes = [16, 4], strides = [1, 1]} : vector<48x4xf32> to vector<16x4xf32>
    %139 = arith.mulf %138, %135 : vector<16x4xf32>
    %140 = vector.extract_strided_slice %125 {offsets = [32, 0], sizes = [16, 4], strides = [1, 1]} : vector<48x4xf32> to vector<16x4xf32>
    %141 = arith.mulf %140, %135 : vector<16x4xf32>
    %cst_50 = arith.constant 0.000000e+00 : f32
    %142 = vector.broadcast %cst_50 : f32 to vector<16x100xf32>
    %143 = tpu.concatenate %123, %137, %139, %141, %142 in 1 : vector<16x16xf32>, vector<16x4xf32>, vector<16x4xf32>, vector<16x4xf32>, vector<16x100xf32> -> vector<16x128xf32>
    %c8_i32 = arith.constant 8 : i32
    %144 = arith.muli %arg0, %c8_i32 : i32
    %c0_51 = arith.constant 0 : index
    %c0_52 = arith.constant 0 : index
    %145 = vector.load %arg2[%c0_51, %c0_52] : memref<1x16xi32, #tpu.memory_space<vmem>>, vector<1x16xi32>
    %146 = tpu.iota {dimensions = array<i32: 0>} : vector<8x16xi32>
    %147 = vector.broadcast %144 : i32 to vector<8x16xi32>
    %148 = arith.addi %147, %146 : vector<8x16xi32>
    %149 = vector.broadcast %145 : vector<1x16xi32> to vector<8x16xi32>
    %150 = arith.cmpi eq, %148, %149 : vector<8x16xi32>
    %151 = arith.extui %150 : vector<8x16xi1> to vector<8x16xi32>
    %152 = arith.sitofp %151 : vector<8x16xi32> to vector<8x16xf32>
    %c0_53 = arith.constant 0 : index
    %c0_54 = arith.constant 0 : index
    %153 = vector.load %arg7[%c0_53, %c0_54] : memref<8x128xf32, #tpu.memory_space<vmem>>, vector<8x128xf32>
    %cst_55 = arith.constant dense<0.000000e+00> : vector<8x128xf32>
    %154 = tpu.matmul %152, %143, %cst_55 {dimension_numbers = #tpu.dot_dimension_numbers<[1], [0], [0], [1], [0, 0, 1, 1], [], []>} : vector<8x16xf32>, vector<16x128xf32>, vector<8x128xf32> -> vector<8x128xf32>
    %155 = arith.addf %153, %154 : vector<8x128xf32>
    %c0_56 = arith.constant 0 : index
    %c0_57 = arith.constant 0 : index
    %156 = vector.load %arg7[%c0_56, %c0_57] : memref<8x128xf32, #tpu.memory_space<vmem>>, vector<8x128xf32>
    tpu.vector_store %arg7[%c0_56, %c0_57], %155 {strides = array<i32>} : memref<8x128xf32, #tpu.memory_space<vmem>>, vector<8x128xf32>,
    %c0_i32_58 = arith.constant 0 : i32
    %157 = arith.cmpi eq, %arg1, %c0_i32_58 : i32
    %158 = arith.extui %157 : i1 to i32
    %c0_i32_59 = arith.constant 0 : i32
    %159 = arith.cmpi ne, %158, %c0_i32_59 : i32
    scf.if %159 {
      %c0_60 = arith.constant 0 : index
      %c0_61 = arith.constant 0 : index
      %160 = vector.load %arg7[%c0_60, %c0_61] : memref<8x128xf32, #tpu.memory_space<vmem>>, vector<8x128xf32>
      %c0_62 = arith.constant 0 : index
      %c0_63 = arith.constant 0 : index
      %161 = vector.load %arg4[%c0_62, %c0_63] : memref<8x1xf32, #tpu.memory_space<vmem>>, vector<8x1xf32>
      %162 = vector.broadcast %161 : vector<8x1xf32> to vector<8x128xf32>
      %163 = arith.mulf %160, %162 : vector<8x128xf32>
      %c0_64 = arith.constant 0 : index
      %c0_65 = arith.constant 0 : index
      %164 = vector.load %arg7[%c0_64, %c0_65] : memref<8x128xf32, #tpu.memory_space<vmem>>, vector<8x128xf32>
      tpu.vector_store %arg7[%c0_64, %c0_65], %163 {strides = array<i32>} : memref<8x128xf32, #tpu.memory_space<vmem>>, vector<8x128xf32>,
    } else {
    }
    return
  }
  func.func @transform_0(%arg0: i32, %arg1: i32) -> (i32, i32) {
    %c0_i32 = arith.constant 0 : i32
    %c0_i32_0 = arith.constant 0 : i32
    return %c0_i32, %arg1 : i32, i32
  }
  func.func @transform_1(%arg0: i32, %arg1: i32) -> (i32, i32) {
    %c0_i32 = arith.constant 0 : i32
    %c0_i32_0 = arith.constant 0 : i32
    return %arg1, %c0_i32 : i32, i32
  }
  func.func @transform_2(%arg0: i32, %arg1: i32) -> (i32, i32) {
    %c0_i32 = arith.constant 0 : i32
    %c0_i32_0 = arith.constant 0 : i32
    return %arg0, %c0_i32 : i32, i32
  }
  func.func @transform_3(%arg0: i32, %arg1: i32) -> (i32, i32) {
    %c0_i32 = arith.constant 0 : i32
    %c0_i32_0 = arith.constant 0 : i32
    %c0_i32_1 = arith.constant 0 : i32
    return %c0_i32, %c0_i32_0 : i32, i32
  }
  func.func @transform_4(%arg0: i32, %arg1: i32) -> (i32, i32) {
    %c0_i32 = arith.constant 0 : i32
    %c0_i32_0 = arith.constant 0 : i32
    %c0_i32_1 = arith.constant 0 : i32
    return %c0_i32, %c0_i32_0 : i32, i32
  }
  func.func @transform_5(%arg0: i32, %arg1: i32) -> (i32, i32) {
    %c0_i32 = arith.constant 0 : i32
    %c0_i32_0 = arith.constant 0 : i32
    return %arg0, %c0_i32 : i32, i32
  }
}

</mosaic_0001>

<llo_original>
// kernel: tpu_custom_call.1
$region0: #{tpu_custom_call.1}
  #allocation0 [shape = 'u32[]', space=smem, size = 0x4, offset = 0x4, fixed_abs, tag = 'smem constant byte address 0x4 - core index']
  #allocation1 [shape = 'u32[144,128]{1,0:T(1,128)}', space=vmem, size = 0x12000, scoped, tag = 'internal scratch']
  %s0 = inlined_call_operand.vmem [shape: s32[1,16], index: 0, kind: input, shape index: {}]
  %s1 = inlined_call_operand.vmem [shape: f32[16,128], index: 1, kind: input, shape index: {}]
  %s2 = inlined_call_operand.vmem [shape: f32[8,1], index: 2, kind: input, shape index: {}]
  %s3 = inlined_call_operand.vmem [shape: f32[216,16], index: 3, kind: input, shape index: {}]
  %s4 = inlined_call_operand.vmem [shape: f32[48,16], index: 4, kind: input, shape index: {}]
  %s5 = inlined_call_operand.hbm [shape: f32[8,128], index: 5, kind: output, shape index: {}]
  %s6 = sld [smem:[#allocation0]]
  $region38: #{tpu_custom_call.1} parent=0
    _
  %s8 = ssub.s32 1, %s6
  %s9 = scalar_select 0, %s8, %s6
  $region1: #{tpu_custom_call.1} parent=0
    #allocation2 [shape = 'u8[4096]{0}', space=vmem, size = 0x1000, scoped, tag = 'output window, operand 0, single buffered']
    #allocation3 [shape = 's32[1]{0}', space=sflag, size = 0x4, scoped, tag = 'scoped memory for tpu_custom_call.1']
    %10 = vsyncpa [#allocation3], 0
    // Predicated region
    $region2: #{tpu_custom_call.1} parent=1 // pred_check
      _
    $region3: #{tpu_custom_call.1} parent=1 // pred_check_branch
      %12 = sbr.rel (0) target = $region5
    $region4: #{tpu_custom_call.1} parent=1 // pred_region
      _
    $region5: #{tpu_custom_call.1} parent=1 // pred_fallthru
      _
    // Predicated region
    $region6: #{tpu_custom_call.1} parent=1 // pred_check
      _
    $region7: #{tpu_custom_call.1} parent=1 // pred_check_branch
      %14 = sbr.rel (0) target = $region9
    $region8: #{tpu_custom_call.1} parent=1 // pred_region
      _
    $region9: #{tpu_custom_call.1} parent=1 // pred_fallthru
      _
    // Predicated region
    $region10: #{tpu_custom_call.1} parent=1 // pred_check
      _
    $region11: #{tpu_custom_call.1} parent=1 // pred_check_branch
      %16 = sbr.rel (0) target = $region13
    $region12: #{tpu_custom_call.1} parent=1 // pred_region
      _
    $region13: #{tpu_custom_call.1} parent=1 // pred_fallthru
      _
    // Predicated region
    $region14: #{tpu_custom_call.1} parent=1 // pred_check
      _
    $region15: #{tpu_custom_call.1} parent=1 // pred_check_branch
      %18 = sbr.rel (0) target = $region17
    $region16: #{tpu_custom_call.1} parent=1 // pred_region
      _
    $region17: #{tpu_custom_call.1} parent=1 // pred_fallthru
      _
    // Predicated region
    $region18: #{tpu_custom_call.1} parent=1 // pred_check
      _
    $region19: #{tpu_custom_call.1} parent=1 // pred_check_branch
      %20 = sbr.rel (0) target = $region21
    $region20: #{tpu_custom_call.1} parent=1 // pred_region
      _
    $region21: #{tpu_custom_call.1} parent=1 // pred_fallthru
      _
    %p21 = scmp.eq.s32.totalorder 0, 0
    // Predicated region
    $region22: #{tpu_custom_call.1} parent=1 // pred_check
      %p22 = pneg %p21
    $region23: #{tpu_custom_call.1} parent=1 // pred_check_branch
      %24 = sbr.rel (%p22) target = $region25
    $region24: #{tpu_custom_call.1} parent=1 // pred_region
      %25 = vst [vmem:[#allocation2] sm:$0xff] 0.0
    $region25: #{tpu_custom_call.1} parent=1 // pred_fallthru
      _
    %v26 = vld [vmem:[%s1] sm:$0xff]
    %v27 = vld [vmem:[%s1 + $0x8] sm:$0xff]
    %30 = vrot.lane.b32.xlu0 %v26, 118
    %v31 = vpop.permute.xlu0 %30
    %32 = vrot.lane.b32.xlu0 %v27, 118
    %v33 = vpop.permute.xlu0 %32
    %34 = vrot.lane.b32.xlu0 %v26, 108
    %v35 = vpop.permute.xlu0 %34
    %36 = vrot.lane.b32.xlu0 %v27, 108
    %v37 = vpop.permute.xlu0 %36
    %v38 = vld [vmem:[%s3] sm:$0xff]
    %v39 = vld [vmem:[%s3 + $0x8] sm:$0x3]
    %40 = vrot.lane.b32.xlu0 %v26, 88
    %v41 = vpop.permute.xlu0 %40
    %42 = vrot.lane.b32.xlu0 %v27, 88
    %v43 = vpop.permute.xlu0 %42
    %44 = vrot.lane.b32.xlu0 %v31, 88
    %v45 = vpop.permute.xlu0 %44
    %46 = vrot.lane.b32.xlu0 %v33, 88
    %v47 = vpop.permute.xlu0 %46
    %48 = vrot.lane.b32.xlu0 %v35, 88
    %v49 = vpop.permute.xlu0 %48
    %50 = vrot.lane.b32.xlu0 %v37, 88
    %v51 = vpop.permute.xlu0 %50
    %vm52 = vcmask 80896
    %v53 = vsel %vm52, %v41, 0
    %v55 = vsel %vm52, %v43, 0
    %v57 = vsel %vm52, %v45, 0
    %v59 = vsel %vm52, %v47, 0
    %v61 = vsel %vm52, %v49, 0
    %v63 = vsel %vm52, %v51, 0
    %vm65 = vcmask 1041408
    %v67 = vsel %vm65, %v39, 0
    %69 = vmatprep.subr.mxu0 0.0
    %70 = vmatpush1.msra.mxu0 0.0
    %71 = vmatprep.subr.mxu0 0.0
    %72 = vmatpush1.msra.mxu0 0.0
    %73 = vmatprep.subr.mxu0 0.0
    %74 = vmatpush1.msra.mxu0 0.0
    %75 = vmatprep.subr.mxu0 0.0
    %76 = vmatpush1.msra.mxu0 0.0
    %77 = vmatprep.subr.mxu0 0.0
    %78 = vmatpush1.msra.mxu0 0.0
    %79 = vmatprep.subr.mxu0 0.0
    %80 = vmatpush1.msra.mxu0 0.0
    %81 = vmatprep.subr.mxu0 0.0
    %82 = vmatpush1.msra.mxu0 0.0
    %83 = vmatprep.subr.mxu0 0.0
    %84 = vmatpush1.msra.mxu0 0.0
    %85 = vmatprep.subr.mxu0 0.0
    %86 = vmatpush1.msra.mxu0 0.0
    %87 = vmatprep.subr.mxu0 0.0
    %88 = vmatpush1.msra.mxu0 0.0
    %89 = vmatprep.subr.mxu0 0.0
    %90 = vmatpush1.msra.mxu0 0.0
    %91 = vmatprep.subr.mxu0 0.0
    %92 = vmatpush1.msra.mxu0 0.0
    %93 = vmatprep.subr.mxu0 0.0
    %94 = vmatpush1.msra.mxu0 0.0
    %95 = vmatprep.subr.mxu0 0.0
    %96 = vmatpush1.msra.mxu0 0.0
    %97 = vmatprep.subr.mxu0 0.0
    %98 = vmatpush1.msra.mxu0 %v67
    %99 = vmatprep.subr.mxu0 0.0
    %100 = vmatpush1.msra.mxu0 %v38
    %101 = vmatprep.subr.mxu0 0.0
    %102 = vmatpush2.msra.mxu0 0.0
    %103 = vmatprep.subr.mxu0 0.0
    %104 = vmatpush2.msra.mxu0 0.0
    %105 = vmatprep.subr.mxu0 0.0
    %106 = vmatpush2.msra.mxu0 0.0
    %107 = vmatprep.subr.mxu0 0.0
    %108 = vmatpush2.msra.mxu0 0.0
    %109 = vmatprep.subr.mxu0 0.0
    %110 = vmatpush2.msra.mxu0 0.0
    %111 = vmatprep.subr.mxu0 0.0
    %112 = vmatpush2.msra.mxu0 0.0
    %113 = vmatprep.subr.mxu0 0.0
    %114 = vmatpush2.msra.mxu0 0.0
    %115 = vmatprep.subr.mxu0 0.0
    %116 = vmatpush2.msra.mxu0 0.0
    %117 = vmatprep.subr.mxu0 0.0
    %118 = vmatpush2.msra.mxu0 0.0
    %119 = vmatprep.subr.mxu0 0.0
    %120 = vmatpush2.msra.mxu0 0.0
    %121 = vmatprep.subr.mxu0 0.0
    %122 = vmatpush2.msra.mxu0 0.0
    %123 = vmatprep.subr.mxu0 0.0
    %124 = vmatpush2.msra.mxu0 0.0
    %125 = vmatprep.subr.mxu0 0.0
    %126 = vmatpush2.msra.mxu0 0.0
    %127 = vmatprep.subr.mxu0 0.0
    %128 = vmatpush2.msra.mxu0 0.0
    %129 = vmatprep.subr.mxu0 0.0
    %130 = vmatpush2.msra.mxu0 0.0
    %131 = vmatprep.subr.mxu0 0.0
    %132 = vmatpush2.msra.mxu0 0.0
    %133 = vmatprep.mubr.f32.mxu0 0.0
    %134 = vmatmul.mubr.f32.gmra.mxu0 %v53
    %v135 = vpop.f32.mrf.mxu0
    %v136 = vadd.f32 0.0, %v135
    %v137 = vpop.f32.mrf.mxu0
    %138 = vmatprep.mubr.f32.mxu0 0.0
    %139 = vmatmul.mubr.f32.gmra.mxu0 %v55
    %v140 = vpop.f32.mrf.mxu0
    %v141 = vadd.f32 0.0, %v140
    %v142 = vpop.f32.mrf.mxu0
    %143 = vmatprep.mubr.f32.mxu0 0.0
    %144 = vmatmul.mubr.f32.gmra.mxu0 %v57
    %v145 = vpop.f32.mrf.mxu0
    %v146 = vadd.f32 0.0, %v145
    %v147 = vpop.f32.mrf.mxu0
    %148 = vmatprep.mubr.f32.mxu0 0.0
    %149 = vmatmul.mubr.f32.gmra.mxu0 %v59
    %v150 = vpop.f32.mrf.mxu0
    %v151 = vadd.f32 0.0, %v150
    %v152 = vpop.f32.mrf.mxu0
    %153 = vmatprep.mubr.f32.mxu0 0.0
    %154 = vmatmul.mubr.f32.gmra.mxu0 %v61
    %v155 = vpop.f32.mrf.mxu0
    %v156 = vadd.f32 0.0, %v155
    %v157 = vpop.f32.mrf.mxu0
    %158 = vmatprep.mubr.f32.mxu0 0.0
    %159 = vmatmul.mubr.f32.gmra.mxu0 %v63
    %v160 = vpop.f32.mrf.mxu0
    %v161 = vadd.f32 0.0, %v160
    %v162 = vpop.f32.mrf.mxu0
    %163 = vdwg.mxu0
    %v164 = vmul.f32 %v136, %v136
    %v165 = vmul.f32 %v141, %v141
    %v166 = vmul.f32 %v146, %v146
    %v167 = vmul.f32 %v151, %v151
    %v168 = vadd.f32 %v164, %v166
    %v169 = vadd.f32 %v165, %v167
    %v170 = vmul.f32 %v156, %v156
    %v171 = vmul.f32 %v161, %v161
    %v172 = vadd.f32 %v168, %v170
    %v173 = vadd.f32 %v169, %v171
    %v174 = vmax.f32 %v172, 1e-08
    %v175 = vmax.f32 %v173, 1e-08
    %v176 = vrsqrt.pop %v174
    %v177 = vmul.f32 %v174, %v176
    %vm178 = vcmp.eq.f32.partialorder %v174, inf
    %v179 = vsel %vm178, %v174, %v177
    %vm180 = vcmp.eq.f32.partialorder %v174, 0.0
    %v181 = vand.u32 %v174, 2147483648
    %v182 = vsel %vm180, %v181, %v179
    %v183 = vrsqrt.pop %v175
    %v184 = vmul.f32 %v175, %v183
    %vm185 = vcmp.eq.f32.partialorder %v175, inf
    %v186 = vsel %vm185, %v175, %v184
    %vm187 = vcmp.eq.f32.partialorder %v175, 0.0
    %v188 = vand.u32 %v175, 2147483648
    %v189 = vsel %vm187, %v188, %v186
    %v190 = vld [vmem:[%s3 + $0x10] sm:$0xff]
    %v191 = vld [vmem:[%s3 + $0x18] sm:$0xff]
    %v192 = vld [vmem:[%s3 + $0x20] sm:$0xff]
    %v193 = vld [vmem:[%s3 + $0x28] sm:$0xff]
    %v194 = vld [vmem:[%s3 + $0x30] sm:$0xff]
    %v195 = vld [vmem:[%s3 + $0x38] sm:$0xff]
    %v196 = vld [vmem:[%s3 + $0x40] sm:$0x3]
    %v198 = vsel %vm52, %v182, 0
    %v201 = vsel %vm52, %v189, 0
    %v204 = vsel %vm65, %v196, 0
    %206 = vmatprep.subr.mxu0 0.0
    %207 = vmatpush1.msra.mxu0 0.0
    %208 = vmatprep.subr.mxu0 0.0
    %209 = vmatpush1.msra.mxu0 0.0
    %210 = vmatprep.subr.mxu0 0.0
    %211 = vmatpush1.msra.mxu0 0.0
    %212 = vmatprep.subr.mxu0 0.0
    %213 = vmatpush1.msra.mxu0 0.0
    %214 = vmatprep.subr.mxu0 0.0
    %215 = vmatpush1.msra.mxu0 0.0
    %216 = vmatprep.subr.mxu0 0.0
    %217 = vmatpush1.msra.mxu0 0.0
    %218 = vmatprep.subr.mxu0 0.0
    %219 = vmatpush1.msra.mxu0 0.0
    %220 = vmatprep.subr.mxu0 0.0
    %221 = vmatpush1.msra.mxu0 0.0
    %222 = vmatprep.subr.mxu0 0.0
    %223 = vmatpush1.msra.mxu0 0.0
    %224 = vmatprep.subr.mxu0 0.0
    %225 = vmatpush1.msra.mxu0 0.0
    %226 = vmatprep.subr.mxu0 0.0
    %227 = vmatpush1.msra.mxu0 0.0
    %228 = vmatprep.subr.mxu0 0.0
    %229 = vmatpush1.msra.mxu0 0.0
    %230 = vmatprep.subr.mxu0 0.0
    %231 = vmatpush1.msra.mxu0 0.0
    %232 = vmatprep.subr.mxu0 0.0
    %233 = vmatpush1.msra.mxu0 0.0
    %234 = vmatprep.subr.mxu0 0.0
    %235 = vmatpush1.msra.mxu0 %v204
    %236 = vmatprep.subr.mxu0 0.0
    %237 = vmatpush1.msra.mxu0 %v195
    %238 = vmatprep.subr.mxu0 0.0
    %239 = vmatpush2.msra.mxu0 0.0
    %240 = vmatprep.subr.mxu0 0.0
    %241 = vmatpush2.msra.mxu0 0.0
    %242 = vmatprep.subr.mxu0 0.0
    %243 = vmatpush2.msra.mxu0 0.0
    %244 = vmatprep.subr.mxu0 0.0
    %245 = vmatpush2.msra.mxu0 0.0
    %246 = vmatprep.subr.mxu0 0.0
    %247 = vmatpush2.msra.mxu0 0.0
    %248 = vmatprep.subr.mxu0 0.0
    %249 = vmatpush2.msra.mxu0 0.0
    %250 = vmatprep.subr.mxu0 0.0
    %251 = vmatpush2.msra.mxu0 0.0
    %252 = vmatprep.subr.mxu0 0.0
    %253 = vmatpush2.msra.mxu0 0.0
    %254 = vmatprep.subr.mxu0 0.0
    %255 = vmatpush2.msra.mxu0 0.0
    %256 = vmatprep.subr.mxu0 0.0
    %257 = vmatpush2.msra.mxu0 0.0
    %258 = vmatprep.subr.mxu0 0.0
    %259 = vmatpush2.msra.mxu0 0.0
    %260 = vmatprep.subr.mxu0 0.0
    %261 = vmatpush2.msra.mxu0 0.0
    %262 = vmatprep.subr.mxu0 0.0
    %263 = vmatpush2.msra.mxu0 0.0
    %264 = vmatprep.subr.mxu0 0.0
    %265 = vmatpush2.msra.mxu0 0.0
    %266 = vmatprep.subr.mxu0 0.0
    %267 = vmatpush2.msra.mxu0 0.0
    %268 = vmatprep.subr.mxu0 0.0
    %269 = vmatpush2.msra.mxu0 0.0
    %270 = vmatprep.mubr.f32.mxu0 0.0
    %271 = vmatmul.mubr.f32.gmra.mxu0 %v198
    %v272 = vpop.f32.mrf.mxu0
    %v273 = vadd.f32 0.0, %v272
    %v274 = vpop.f32.mrf.mxu0
    %275 = vmatprep.mubr.f32.mxu0 0.0
    %276 = vmatmul.mubr.f32.gmra.mxu0 %v201
    %v277 = vpop.f32.mrf.mxu0
    %v278 = vadd.f32 0.0, %v277
    %v279 = vpop.f32.mrf.mxu0
    %280 = vdwg.mxu0
    %vm281 = vcmask 326656
    %v282 = vsel %vm281, %v26, 0
    %v284 = vsel %vm281, %v27, 0
    %286 = vmatprep.subr.mxu0 0.0
    %287 = vmatpush1.msra.mxu0 0.0
    %288 = vmatprep.subr.mxu0 0.0
    %289 = vmatpush1.msra.mxu0 0.0
    %290 = vmatprep.subr.mxu0 0.0
    %291 = vmatpush1.msra.mxu0 0.0
    %292 = vmatprep.subr.mxu0 0.0
    %293 = vmatpush1.msra.mxu0 0.0
    %294 = vmatprep.subr.mxu0 0.0
    %295 = vmatpush1.msra.mxu0 0.0
    %296 = vmatprep.subr.mxu0 0.0
    %297 = vmatpush1.msra.mxu0 0.0
    %298 = vmatprep.subr.mxu0 0.0
    %299 = vmatpush1.msra.mxu0 0.0
    %300 = vmatprep.subr.mxu0 0.0
    %301 = vmatpush1.msra.mxu0 0.0
    %302 = vmatprep.subr.mxu0 0.0
    %303 = vmatpush1.msra.mxu0 0.0
    %304 = vmatprep.subr.mxu0 0.0
    %305 = vmatpush1.msra.mxu0 0.0
    %306 = vmatprep.subr.mxu0 0.0
    %307 = vmatpush1.msra.mxu0 0.0
    %308 = vmatprep.subr.mxu0 0.0
    %309 = vmatpush1.msra.mxu0 %v194
    %310 = vmatprep.subr.mxu0 0.0
    %311 = vmatpush1.msra.mxu0 %v193
    %312 = vmatprep.subr.mxu0 0.0
    %313 = vmatpush1.msra.mxu0 %v192
    %314 = vmatprep.subr.mxu0 0.0
    %315 = vmatpush1.msra.mxu0 %v191
    %316 = vmatprep.subr.mxu0 0.0
    %317 = vmatpush1.msra.mxu0 %v190
    %318 = vmatprep.subr.mxu0 0.0
    %319 = vmatpush2.msra.mxu0 0.0
    %320 = vmatprep.subr.mxu0 0.0
    %321 = vmatpush2.msra.mxu0 0.0
    %322 = vmatprep.subr.mxu0 0.0
    %323 = vmatpush2.msra.mxu0 0.0
    %324 = vmatprep.subr.mxu0 0.0
    %325 = vmatpush2.msra.mxu0 0.0
    %326 = vmatprep.subr.mxu0 0.0
    %327 = vmatpush2.msra.mxu0 0.0
    %328 = vmatprep.subr.mxu0 0.0
    %329 = vmatpush2.msra.mxu0 0.0
    %330 = vmatprep.subr.mxu0 0.0
    %331 = vmatpush2.msra.mxu0 0.0
    %332 = vmatprep.subr.mxu0 0.0
    %333 = vmatpush2.msra.mxu0 0.0
    %334 = vmatprep.subr.mxu0 0.0
    %335 = vmatpush2.msra.mxu0 0.0
    %336 = vmatprep.subr.mxu0 0.0
    %337 = vmatpush2.msra.mxu0 0.0
    %338 = vmatprep.subr.mxu0 0.0
    %339 = vmatpush2.msra.mxu0 0.0
    %340 = vmatprep.subr.mxu0 0.0
    %341 = vmatpush2.msra.mxu0 0.0
    %342 = vmatprep.subr.mxu0 0.0
    %343 = vmatpush2.msra.mxu0 0.0
    %344 = vmatprep.subr.mxu0 0.0
    %345 = vmatpush2.msra.mxu0 0.0
    %346 = vmatprep.subr.mxu0 0.0
    %347 = vmatpush2.msra.mxu0 0.0
    %348 = vmatprep.subr.mxu0 0.0
    %349 = vmatpush2.msra.mxu0 0.0
    %350 = vmatprep.mubr.f32.mxu0 0.0
    %351 = vmatmul.mubr.f32.gmra.mxu0 %v282
    %v352 = vpop.f32.mrf.mxu0
    %v353 = vadd.f32 %v273, %v352
    %v354 = vpop.f32.mrf.mxu0
    %355 = vmatprep.mubr.f32.mxu0 0.0
    %356 = vmatmul.mubr.f32.gmra.mxu0 %v284
    %v357 = vpop.f32.mrf.mxu0
    %v358 = vadd.f32 %v278, %v357
    %v359 = vpop.f32.mrf.mxu0
    %360 = vdwg.mxu0
    %v361 = vld [vmem:[%s4] sm:$0x1]
    %v362 = vlaneseq
    %v363 = vshrl.u32 %v362, 7
    %v364 = vsub.s32 0, %v363
    %v365 = vrot.slane %v361, %v364
    %v366 = vadd.f32 %v353, %v365
    %v367 = vadd.f32 %v358, %v365
    %v368 = vld [vmem:[%s3 + $0x48] sm:$0xff]
    %v369 = vld [vmem:[%s3 + $0x50] sm:$0x3]
    %v371 = vsel %vm52, %v136, 0
    %v374 = vsel %vm52, %v141, 0
    %v377 = vsel %vm52, %v146, 0
    %v380 = vsel %vm52, %v151, 0
    %v383 = vsel %vm52, %v156, 0
    %v386 = vsel %vm52, %v161, 0
    %v389 = vsel %vm65, %v369, 0
    %391 = vmatprep.subr.mxu0 0.0
    %392 = vmatpush1.msra.mxu0 0.0
    %393 = vmatprep.subr.mxu0 0.0
    %394 = vmatpush1.msra.mxu0 0.0
    %395 = vmatprep.subr.mxu0 0.0
    %396 = vmatpush1.msra.mxu0 0.0
    %397 = vmatprep.subr.mxu0 0.0
    %398 = vmatpush1.msra.mxu0 0.0
    %399 = vmatprep.subr.mxu0 0.0
    %400 = vmatpush1.msra.mxu0 0.0
    %401 = vmatprep.subr.mxu0 0.0
    %402 = vmatpush1.msra.mxu0 0.0
    %403 = vmatprep.subr.mxu0 0.0
    %404 = vmatpush1.msra.mxu0 0.0
    %405 = vmatprep.subr.mxu0 0.0
    %406 = vmatpush1.msra.mxu0 0.0
    %407 = vmatprep.subr.mxu0 0.0
    %408 = vmatpush1.msra.mxu0 0.0
    %409 = vmatprep.subr.mxu0 0.0
    %410 = vmatpush1.msra.mxu0 0.0
    %411 = vmatprep.subr.mxu0 0.0
    %412 = vmatpush1.msra.mxu0 0.0
    %413 = vmatprep.subr.mxu0 0.0
    %414 = vmatpush1.msra.mxu0 0.0
    %415 = vmatprep.subr.mxu0 0.0
    %416 = vmatpush1.msra.mxu0 0.0
    %417 = vmatprep.subr.mxu0 0.0
    %418 = vmatpush1.msra.mxu0 0.0
    %419 = vmatprep.subr.mxu0 0.0
    %420 = vmatpush1.msra.mxu0 %v389
    %421 = vmatprep.subr.mxu0 0.0
    %422 = vmatpush1.msra.mxu0 %v368
    %423 = vmatprep.subr.mxu0 0.0
    %424 = vmatpush2.msra.mxu0 0.0
    %425 = vmatprep.subr.mxu0 0.0
    %426 = vmatpush2.msra.mxu0 0.0
    %427 = vmatprep.subr.mxu0 0.0
    %428 = vmatpush2.msra.mxu0 0.0
    %429 = vmatprep.subr.mxu0 0.0
    %430 = vmatpush2.msra.mxu0 0.0
    %431 = vmatprep.subr.mxu0 0.0
    %432 = vmatpush2.msra.mxu0 0.0
    %433 = vmatprep.subr.mxu0 0.0
    %434 = vmatpush2.msra.mxu0 0.0
    %435 = vmatprep.subr.mxu0 0.0
    %436 = vmatpush2.msra.mxu0 0.0
    %437 = vmatprep.subr.mxu0 0.0
    %438 = vmatpush2.msra.mxu0 0.0
    %439 = vmatprep.subr.mxu0 0.0
    %440 = vmatpush2.msra.mxu0 0.0
    %441 = vmatprep.subr.mxu0 0.0
    %442 = vmatpush2.msra.mxu0 0.0
    %443 = vmatprep.subr.mxu0 0.0
    %444 = vmatpush2.msra.mxu0 0.0
    %445 = vmatprep.subr.mxu0 0.0
    %446 = vmatpush2.msra.mxu0 0.0
    %447 = vmatprep.subr.mxu0 0.0
    %448 = vmatpush2.msra.mxu0 0.0
    %449 = vmatprep.subr.mxu0 0.0
    %450 = vmatpush2.msra.mxu0 0.0
    %451 = vmatprep.subr.mxu0 0.0
    %452 = vmatpush2.msra.mxu0 0.0
    %453 = vmatprep.subr.mxu0 0.0
    %454 = vmatpush2.msra.mxu0 0.0
    %455 = vmatprep.mubr.f32.mxu0 0.0
    %456 = vmatmul.mubr.f32.gmra.mxu0 %v371
    %v457 = vpop.f32.mrf.mxu0
    %v458 = vadd.f32 0.0, %v457
    %v459 = vpop.f32.mrf.mxu0
    %460 = vmatprep.mubr.f32.mxu0 0.0
    %461 = vmatmul.mubr.f32.gmra.mxu0 %v374
    %v462 = vpop.f32.mrf.mxu0
    %v463 = vadd.f32 0.0, %v462
    %v464 = vpop.f32.mrf.mxu0
    %465 = vmatprep.mubr.f32.mxu0 0.0
    %466 = vmatmul.mubr.f32.gmra.mxu0 %v377
    %v467 = vpop.f32.mrf.mxu0
    %v468 = vadd.f32 0.0, %v467
    %v469 = vpop.f32.mrf.mxu0
    %470 = vmatprep.mubr.f32.mxu0 0.0
    %471 = vmatmul.mubr.f32.gmra.mxu0 %v380
    %v472 = vpop.f32.mrf.mxu0
    %v473 = vadd.f32 0.0, %v472
    %v474 = vpop.f32.mrf.mxu0
    %475 = vmatprep.mubr.f32.mxu0 0.0
    %476 = vmatmul.mubr.f32.gmra.mxu0 %v383
    %v477 = vpop.f32.mrf.mxu0
    %v478 = vadd.f32 0.0, %v477
    %v479 = vpop.f32.mrf.mxu0
    %480 = vmatprep.mubr.f32.mxu0 0.0
    %481 = vmatmul.mubr.f32.gmra.mxu0 %v386
    %v482 = vpop.f32.mrf.mxu0
    %v483 = vadd.f32 0.0, %v482
    %v484 = vpop.f32.mrf.mxu0
    %485 = vdwg.mxu0
    %v486 = vxor.u32 %v366, 2147483648
    %v487 = vxor.u32 %v367, 2147483648
    %v488 = vmul.f32 %v486, 1.442695
    %v489 = vpow.pop %v488
    %v490 = vmul.f32 %v487, 1.442695
    %v491 = vpow.pop %v490
    %v492 = vadd.f32 %v489, 1.0
    %v493 = vadd.f32 %v491, 1.0
    %v494 = vrcp.pop %v492
    %v495 = vmul.f32 1.0, %v494
    %v496 = vrcp.pop %v493
    %v497 = vmul.f32 1.0, %v496
    %v498 = vld [vmem:[%s3 + $0x58] sm:$0xff]
    %v499 = vld [vmem:[%s3 + $0x60] sm:$0xff]
    %v500 = vld [vmem:[%s4 + $0x8] sm:$0x1]
    %v501 = vlaneseq
    %v502 = vshrl.u32 %v501, 7
    %v503 = vsub.s32 0, %v502
    %v504 = vrot.slane %v500, %v503
    %vm505 = vcmask 130048
    %v507 = vsel %vm505, %v495, 0
    %v510 = vsel %vm505, %v497, 0
    %512 = vmatprep.subr.mxu0 0.0
    %513 = vmatpush1.msra.mxu0 0.0
    %514 = vmatprep.subr.mxu0 0.0
    %515 = vmatpush1.msra.mxu0 0.0
    %516 = vmatprep.subr.mxu0 0.0
    %517 = vmatpush1.msra.mxu0 0.0
    %518 = vmatprep.subr.mxu0 0.0
    %519 = vmatpush1.msra.mxu0 0.0
    %520 = vmatprep.subr.mxu0 0.0
    %521 = vmatpush1.msra.mxu0 0.0
    %522 = vmatprep.subr.mxu0 0.0
    %523 = vmatpush1.msra.mxu0 0.0
    %524 = vmatprep.subr.mxu0 0.0
    %525 = vmatpush1.msra.mxu0 0.0
    %526 = vmatprep.subr.mxu0 0.0
    %527 = vmatpush1.msra.mxu0 0.0
    %528 = vmatprep.subr.mxu0 0.0
    %529 = vmatpush1.msra.mxu0 0.0
    %530 = vmatprep.subr.mxu0 0.0
    %531 = vmatpush1.msra.mxu0 0.0
    %532 = vmatprep.subr.mxu0 0.0
    %533 = vmatpush1.msra.mxu0 0.0
    %534 = vmatprep.subr.mxu0 0.0
    %535 = vmatpush1.msra.mxu0 0.0
    %536 = vmatprep.subr.mxu0 0.0
    %537 = vmatpush1.msra.mxu0 0.0
    %538 = vmatprep.subr.mxu0 0.0
    %539 = vmatpush1.msra.mxu0 0.0
    %540 = vmatprep.subr.mxu0 0.0
    %541 = vmatpush1.msra.mxu0 %v499
    %542 = vmatprep.subr.mxu0 0.0
    %543 = vmatpush1.msra.mxu0 %v498
    %544 = vmatprep.subr.mxu0 0.0
    %545 = vmatpush2.msra.mxu0 0.0
    %546 = vmatprep.subr.mxu0 0.0
    %547 = vmatpush2.msra.mxu0 0.0
    %548 = vmatprep.subr.mxu0 0.0
    %549 = vmatpush2.msra.mxu0 0.0
    %550 = vmatprep.subr.mxu0 0.0
    %551 = vmatpush2.msra.mxu0 0.0
    %552 = vmatprep.subr.mxu0 0.0
    %553 = vmatpush2.msra.mxu0 0.0
    %554 = vmatprep.subr.mxu0 0.0
    %555 = vmatpush2.msra.mxu0 0.0
    %556 = vmatprep.subr.mxu0 0.0
    %557 = vmatpush2.msra.mxu0 0.0
    %558 = vmatprep.subr.mxu0 0.0
    %559 = vmatpush2.msra.mxu0 0.0
    %560 = vmatprep.subr.mxu0 0.0
    %561 = vmatpush2.msra.mxu0 0.0
    %562 = vmatprep.subr.mxu0 0.0
    %563 = vmatpush2.msra.mxu0 0.0
    %564 = vmatprep.subr.mxu0 0.0
    %565 = vmatpush2.msra.mxu0 0.0
    %566 = vmatprep.subr.mxu0 0.0
    %567 = vmatpush2.msra.mxu0 0.0
    %568 = vmatprep.subr.mxu0 0.0
    %569 = vmatpush2.msra.mxu0 0.0
    %570 = vmatprep.subr.mxu0 0.0
    %571 = vmatpush2.msra.mxu0 0.0
    %572 = vmatprep.subr.mxu0 0.0
    %573 = vmatpush2.msra.mxu0 0.0
    %574 = vmatprep.subr.mxu0 0.0
    %575 = vmatpush2.msra.mxu0 0.0
    %576 = vmatprep.mubr.f32.mxu0 0.0
    %577 = vmatmul.mubr.f32.gmra.mxu0 %v507
    %v578 = vpop.f32.mrf.mxu0
    %v579 = vadd.f32 %v504, %v578
    %v580 = vpop.f32.mrf.mxu0
    %581 = vmatprep.mubr.f32.mxu0 0.0
    %582 = vmatmul.mubr.f32.gmra.mxu0 %v510
    %v583 = vpop.f32.mrf.mxu0
    %v584 = vadd.f32 %v504, %v583
    %v585 = vpop.f32.mrf.mxu0
    %586 = vdwg.mxu0
    %v587 = vxor.u32 %v579, 2147483648
    %v588 = vxor.u32 %v584, 2147483648
    %v589 = vmul.f32 %v587, 1.442695
    %v590 = vpow.pop %v589
    %v591 = vmul.f32 %v588, 1.442695
    %v592 = vpow.pop %v591
    %v593 = vadd.f32 %v590, 1.0
    %v594 = vadd.f32 %v592, 1.0
    %v595 = vrcp.pop %v593
    %v596 = vmul.f32 1.0, %v595
    %v597 = vrcp.pop %v594
    %v598 = vmul.f32 1.0, %v597
    %v599 = vmul.f32 %v458, %v596
    %v600 = vmul.f32 %v463, %v598
    %v601 = vmul.f32 %v468, %v596
    %v602 = vmul.f32 %v473, %v598
    %v603 = vmul.f32 %v478, %v596
    %v604 = vmul.f32 %v483, %v598
    %v605 = vmax.f32 %v366, 0.0
    %v606 = vmax.f32 %v367, 0.0
    %v607 = vld [vmem:[%s3 + $0x68] sm:$0xf]
    %vm608 = vcmask 31744
    %v610 = vsel %vm608, %v599, 0
    %v613 = vsel %vm608, %v600, 0
    %v616 = vsel %vm608, %v601, 0
    %v619 = vsel %vm608, %v602, 0
    %v622 = vsel %vm608, %v603, 0
    %v625 = vsel %vm608, %v604, 0
    %vm627 = vcmask 1043456
    %v629 = vsel %vm627, %v607, 0
    %631 = vmatprep.subr.mxu0 0.0
    %632 = vmatpush1.msra.mxu0 0.0
    %633 = vmatprep.subr.mxu0 0.0
    %634 = vmatpush1.msra.mxu0 0.0
    %635 = vmatprep.subr.mxu0 0.0
    %636 = vmatpush1.msra.mxu0 0.0
    %637 = vmatprep.subr.mxu0 0.0
    %638 = vmatpush1.msra.mxu0 0.0
    %639 = vmatprep.subr.mxu0 0.0
    %640 = vmatpush1.msra.mxu0 0.0
    %641 = vmatprep.subr.mxu0 0.0
    %642 = vmatpush1.msra.mxu0 0.0
    %643 = vmatprep.subr.mxu0 0.0
    %644 = vmatpush1.msra.mxu0 0.0
    %645 = vmatprep.subr.mxu0 0.0
    %646 = vmatpush1.msra.mxu0 0.0
    %647 = vmatprep.subr.mxu0 0.0
    %648 = vmatpush1.msra.mxu0 0.0
    %649 = vmatprep.subr.mxu0 0.0
    %650 = vmatpush1.msra.mxu0 0.0
    %651 = vmatprep.subr.mxu0 0.0
    %652 = vmatpush1.msra.mxu0 0.0
    %653 = vmatprep.subr.mxu0 0.0
    %654 = vmatpush1.msra.mxu0 0.0
    %655 = vmatprep.subr.mxu0 0.0
    %656 = vmatpush1.msra.mxu0 0.0
    %657 = vmatprep.subr.mxu0 0.0
    %658 = vmatpush1.msra.mxu0 0.0
    %659 = vmatprep.subr.mxu0 0.0
    %660 = vmatpush1.msra.mxu0 0.0
    %661 = vmatprep.subr.mxu0 0.0
    %662 = vmatpush1.msra.mxu0 %v629
    %663 = vmatprep.subr.mxu0 0.0
    %664 = vmatpush2.msra.mxu0 0.0
    %665 = vmatprep.subr.mxu0 0.0
    %666 = vmatpush2.msra.mxu0 0.0
    %667 = vmatprep.subr.mxu0 0.0
    %668 = vmatpush2.msra.mxu0 0.0
    %669 = vmatprep.subr.mxu0 0.0
    %670 = vmatpush2.msra.mxu0 0.0
    %671 = vmatprep.subr.mxu0 0.0
    %672 = vmatpush2.msra.mxu0 0.0
    %673 = vmatprep.subr.mxu0 0.0
    %674 = vmatpush2.msra.mxu0 0.0
    %675 = vmatprep.subr.mxu0 0.0
    %676 = vmatpush2.msra.mxu0 0.0
    %677 = vmatprep.subr.mxu0 0.0
    %678 = vmatpush2.msra.mxu0 0.0
    %679 = vmatprep.subr.mxu0 0.0
    %680 = vmatpush2.msra.mxu0 0.0
    %681 = vmatprep.subr.mxu0 0.0
    %682 = vmatpush2.msra.mxu0 0.0
    %683 = vmatprep.subr.mxu0 0.0
    %684 = vmatpush2.msra.mxu0 0.0
    %685 = vmatprep.subr.mxu0 0.0
    %686 = vmatpush2.msra.mxu0 0.0
    %687 = vmatprep.subr.mxu0 0.0
    %688 = vmatpush2.msra.mxu0 0.0
    %689 = vmatprep.subr.mxu0 0.0
    %690 = vmatpush2.msra.mxu0 0.0
    %691 = vmatprep.subr.mxu0 0.0
    %692 = vmatpush2.msra.mxu0 0.0
    %693 = vmatprep.subr.mxu0 0.0
    %694 = vmatpush2.msra.mxu0 0.0
    %695 = vmatprep.mubr.f32.mxu0 0.0
    %696 = vmatmul.mubr.f32.gmra.mxu0 %v610
    %v697 = vpop.f32.mrf.mxu0
    %v698 = vadd.f32 0.0, %v697
    %v699 = vpop.f32.mrf.mxu0
    %700 = vmatprep.mubr.f32.mxu0 0.0
    %701 = vmatmul.mubr.f32.gmra.mxu0 %v613
    %v702 = vpop.f32.mrf.mxu0
    %v703 = vadd.f32 0.0, %v702
    %v704 = vpop.f32.mrf.mxu0
    %705 = vmatprep.mubr.f32.mxu0 0.0
    %706 = vmatmul.mubr.f32.gmra.mxu0 %v616
    %v707 = vpop.f32.mrf.mxu0
    %v708 = vadd.f32 0.0, %v707
    %v709 = vpop.f32.mrf.mxu0
    %710 = vmatprep.mubr.f32.mxu0 0.0
    %711 = vmatmul.mubr.f32.gmra.mxu0 %v619
    %v712 = vpop.f32.mrf.mxu0
    %v713 = vadd.f32 0.0, %v712
    %v714 = vpop.f32.mrf.mxu0
    %715 = vmatprep.mubr.f32.mxu0 0.0
    %716 = vmatmul.mubr.f32.gmra.mxu0 %v622
    %v717 = vpop.f32.mrf.mxu0
    %v718 = vadd.f32 0.0, %v717
    %v719 = vpop.f32.mrf.mxu0
    %720 = vmatprep.mubr.f32.mxu0 0.0
    %721 = vmatmul.mubr.f32.gmra.mxu0 %v625
    %v722 = vpop.f32.mrf.mxu0
    %v723 = vadd.f32 0.0, %v722
    %v724 = vpop.f32.mrf.mxu0
    %725 = vdwg.mxu0
    %v726 = vmul.f32 %v698, %v698
    %v727 = vmul.f32 %v703, %v703
    %v728 = vmul.f32 %v708, %v708
    %v729 = vmul.f32 %v713, %v713
    %v730 = vadd.f32 %v726, %v728
    %v731 = vadd.f32 %v727, %v729
    %v732 = vmul.f32 %v718, %v718
    %v733 = vmul.f32 %v723, %v723
    %v734 = vadd.f32 %v730, %v732
    %v735 = vadd.f32 %v731, %v733
    %v736 = vmax.f32 %v734, 1e-08
    %v737 = vmax.f32 %v735, 1e-08
    %v738 = vrsqrt.pop %v736
    %v739 = vmul.f32 %v736, %v738
    %vm740 = vcmp.eq.f32.partialorder %v736, inf
    %v741 = vsel %vm740, %v736, %v739
    %vm742 = vcmp.eq.f32.partialorder %v736, 0.0
    %v743 = vand.u32 %v736, 2147483648
    %v744 = vsel %vm742, %v743, %v741
    %v745 = vrsqrt.pop %v737
    %v746 = vmul.f32 %v737, %v745
    %vm747 = vcmp.eq.f32.partialorder %v737, inf
    %v748 = vsel %vm747, %v737, %v746
    %vm749 = vcmp.eq.f32.partialorder %v737, 0.0
    %v750 = vand.u32 %v737, 2147483648
    %v751 = vsel %vm749, %v750, %v748
    %v752 = vld [vmem:[%s3 + $0x70] sm:$0xff]
    %v753 = vld [vmem:[%s3 + $0x78] sm:$0xff]
    %v754 = vld [vmem:[%s3 + $0x80] sm:$0xf]
    %v756 = vsel %vm608, %v744, 0
    %v759 = vsel %vm608, %v751, 0
    %v762 = vsel %vm627, %v754, 0
    %764 = vmatprep.subr.mxu0 0.0
    %765 = vmatpush1.msra.mxu0 0.0
    %766 = vmatprep.subr.mxu0 0.0
    %767 = vmatpush1.msra.mxu0 0.0
    %768 = vmatprep.subr.mxu0 0.0
    %769 = vmatpush1.msra.mxu0 0.0
    %770 = vmatprep.subr.mxu0 0.0
    %771 = vmatpush1.msra.mxu0 0.0
    %772 = vmatprep.subr.mxu0 0.0
    %773 = vmatpush1.msra.mxu0 0.0
    %774 = vmatprep.subr.mxu0 0.0
    %775 = vmatpush1.msra.mxu0 0.0
    %776 = vmatprep.subr.mxu0 0.0
    %777 = vmatpush1.msra.mxu0 0.0
    %778 = vmatprep.subr.mxu0 0.0
    %779 = vmatpush1.msra.mxu0 0.0
    %780 = vmatprep.subr.mxu0 0.0
    %781 = vmatpush1.msra.mxu0 0.0
    %782 = vmatprep.subr.mxu0 0.0
    %783 = vmatpush1.msra.mxu0 0.0
    %784 = vmatprep.subr.mxu0 0.0
    %785 = vmatpush1.msra.mxu0 0.0
    %786 = vmatprep.subr.mxu0 0.0
    %787 = vmatpush1.msra.mxu0 0.0
    %788 = vmatprep.subr.mxu0 0.0
    %789 = vmatpush1.msra.mxu0 0.0
    %790 = vmatprep.subr.mxu0 0.0
    %791 = vmatpush1.msra.mxu0 0.0
    %792 = vmatprep.subr.mxu0 0.0
    %793 = vmatpush1.msra.mxu0 0.0
    %794 = vmatprep.subr.mxu0 0.0
    %795 = vmatpush1.msra.mxu0 %v762
    %796 = vmatprep.subr.mxu0 0.0
    %797 = vmatpush2.msra.mxu0 0.0
    %798 = vmatprep.subr.mxu0 0.0
    %799 = vmatpush2.msra.mxu0 0.0
    %800 = vmatprep.subr.mxu0 0.0
    %801 = vmatpush2.msra.mxu0 0.0
    %802 = vmatprep.subr.mxu0 0.0
    %803 = vmatpush2.msra.mxu0 0.0
    %804 = vmatprep.subr.mxu0 0.0
    %805 = vmatpush2.msra.mxu0 0.0
    %806 = vmatprep.subr.mxu0 0.0
    %807 = vmatpush2.msra.mxu0 0.0
    %808 = vmatprep.subr.mxu0 0.0
    %809 = vmatpush2.msra.mxu0 0.0
    %810 = vmatprep.subr.mxu0 0.0
    %811 = vmatpush2.msra.mxu0 0.0
    %812 = vmatprep.subr.mxu0 0.0
    %813 = vmatpush2.msra.mxu0 0.0
    %814 = vmatprep.subr.mxu0 0.0
    %815 = vmatpush2.msra.mxu0 0.0
    %816 = vmatprep.subr.mxu0 0.0
    %817 = vmatpush2.msra.mxu0 0.0
    %818 = vmatprep.subr.mxu0 0.0
    %819 = vmatpush2.msra.mxu0 0.0
    %820 = vmatprep.subr.mxu0 0.0
    %821 = vmatpush2.msra.mxu0 0.0
    %822 = vmatprep.subr.mxu0 0.0
    %823 = vmatpush2.msra.mxu0 0.0
    %824 = vmatprep.subr.mxu0 0.0
    %825 = vmatpush2.msra.mxu0 0.0
    %826 = vmatprep.subr.mxu0 0.0
    %827 = vmatpush2.msra.mxu0 0.0
    %828 = vmatprep.mubr.f32.mxu0 0.0
    %829 = vmatmul.mubr.f32.gmra.mxu0 %v756
    %v830 = vpop.f32.mrf.mxu0
    %v831 = vadd.f32 0.0, %v830
    %v832 = vpop.f32.mrf.mxu0
    %833 = vmatprep.mubr.f32.mxu0 0.0
    %834 = vmatmul.mubr.f32.gmra.mxu0 %v759
    %v835 = vpop.f32.mrf.mxu0
    %v836 = vadd.f32 0.0, %v835
    %v837 = vpop.f32.mrf.mxu0
    %838 = vdwg.mxu0
    %v840 = vsel %vm505, %v605, 0
    %v843 = vsel %vm505, %v606, 0
    %845 = vmatprep.subr.mxu0 0.0
    %846 = vmatpush1.msra.mxu0 0.0
    %847 = vmatprep.subr.mxu0 0.0
    %848 = vmatpush1.msra.mxu0 0.0
    %849 = vmatprep.subr.mxu0 0.0
    %850 = vmatpush1.msra.mxu0 0.0
    %851 = vmatprep.subr.mxu0 0.0
    %852 = vmatpush1.msra.mxu0 0.0
    %853 = vmatprep.subr.mxu0 0.0
    %854 = vmatpush1.msra.mxu0 0.0
    %855 = vmatprep.subr.mxu0 0.0
    %856 = vmatpush1.msra.mxu0 0.0
    %857 = vmatprep.subr.mxu0 0.0
    %858 = vmatpush1.msra.mxu0 0.0
    %859 = vmatprep.subr.mxu0 0.0
    %860 = vmatpush1.msra.mxu0 0.0
    %861 = vmatprep.subr.mxu0 0.0
    %862 = vmatpush1.msra.mxu0 0.0
    %863 = vmatprep.subr.mxu0 0.0
    %864 = vmatpush1.msra.mxu0 0.0
    %865 = vmatprep.subr.mxu0 0.0
    %866 = vmatpush1.msra.mxu0 0.0
    %867 = vmatprep.subr.mxu0 0.0
    %868 = vmatpush1.msra.mxu0 0.0
    %869 = vmatprep.subr.mxu0 0.0
    %870 = vmatpush1.msra.mxu0 0.0
    %871 = vmatprep.subr.mxu0 0.0
    %872 = vmatpush1.msra.mxu0 0.0
    %873 = vmatprep.subr.mxu0 0.0
    %874 = vmatpush1.msra.mxu0 %v753
    %875 = vmatprep.subr.mxu0 0.0
    %876 = vmatpush1.msra.mxu0 %v752
    %877 = vmatprep.subr.mxu0 0.0
    %878 = vmatpush2.msra.mxu0 0.0
    %879 = vmatprep.subr.mxu0 0.0
    %880 = vmatpush2.msra.mxu0 0.0
    %881 = vmatprep.subr.mxu0 0.0
    %882 = vmatpush2.msra.mxu0 0.0
    %883 = vmatprep.subr.mxu0 0.0
    %884 = vmatpush2.msra.mxu0 0.0
    %885 = vmatprep.subr.mxu0 0.0
    %886 = vmatpush2.msra.mxu0 0.0
    %887 = vmatprep.subr.mxu0 0.0
    %888 = vmatpush2.msra.mxu0 0.0
    %889 = vmatprep.subr.mxu0 0.0
    %890 = vmatpush2.msra.mxu0 0.0
    %891 = vmatprep.subr.mxu0 0.0
    %892 = vmatpush2.msra.mxu0 0.0
    %893 = vmatprep.subr.mxu0 0.0
    %894 = vmatpush2.msra.mxu0 0.0
    %895 = vmatprep.subr.mxu0 0.0
    %896 = vmatpush2.msra.mxu0 0.0
    %897 = vmatprep.subr.mxu0 0.0
    %898 = vmatpush2.msra.mxu0 0.0
    %899 = vmatprep.subr.mxu0 0.0
    %900 = vmatpush2.msra.mxu0 0.0
    %901 = vmatprep.subr.mxu0 0.0
    %902 = vmatpush2.msra.mxu0 0.0
    %903 = vmatprep.subr.mxu0 0.0
    %904 = vmatpush2.msra.mxu0 0.0
    %905 = vmatprep.subr.mxu0 0.0
    %906 = vmatpush2.msra.mxu0 0.0
    %907 = vmatprep.subr.mxu0 0.0
    %908 = vmatpush2.msra.mxu0 0.0
    %909 = vmatprep.mubr.f32.mxu0 0.0
    %910 = vmatmul.mubr.f32.gmra.mxu0 %v840
    %v911 = vpop.f32.mrf.mxu0
    %v912 = vadd.f32 %v831, %v911
    %v913 = vpop.f32.mrf.mxu0
    %914 = vmatprep.mubr.f32.mxu0 0.0
    %915 = vmatmul.mubr.f32.gmra.mxu0 %v843
    %v916 = vpop.f32.mrf.mxu0
    %v917 = vadd.f32 %v836, %v916
    %v918 = vpop.f32.mrf.mxu0
    %919 = vdwg.mxu0
    %v920 = vld [vmem:[%s4 + $0x10] sm:$0x1]
    %v921 = vlaneseq
    %v922 = vshrl.u32 %v921, 7
    %v923 = vsub.s32 0, %v922
    %v924 = vrot.slane %v920, %v923
    %v925 = vadd.f32 %v912, %v924
    %v926 = vadd.f32 %v917, %v924
    %v927 = vld [vmem:[%s3 + $0x88] sm:$0xf]
    %v929 = vsel %vm608, %v698, 0
    %v932 = vsel %vm608, %v703, 0
    %v935 = vsel %vm608, %v708, 0
    %v938 = vsel %vm608, %v713, 0
    %v941 = vsel %vm608, %v718, 0
    %v944 = vsel %vm608, %v723, 0
    %v947 = vsel %vm627, %v927, 0
    %949 = vmatprep.subr.mxu0 0.0
    %950 = vmatpush1.msra.mxu0 0.0
    %951 = vmatprep.subr.mxu0 0.0
    %952 = vmatpush1.msra.mxu0 0.0
    %953 = vmatprep.subr.mxu0 0.0
    %954 = vmatpush1.msra.mxu0 0.0
    %955 = vmatprep.subr.mxu0 0.0
    %956 = vmatpush1.msra.mxu0 0.0
    %957 = vmatprep.subr.mxu0 0.0
    %958 = vmatpush1.msra.mxu0 0.0
    %959 = vmatprep.subr.mxu0 0.0
    %960 = vmatpush1.msra.mxu0 0.0
    %961 = vmatprep.subr.mxu0 0.0
    %962 = vmatpush1.msra.mxu0 0.0
    %963 = vmatprep.subr.mxu0 0.0
    %964 = vmatpush1.msra.mxu0 0.0
    %965 = vmatprep.subr.mxu0 0.0
    %966 = vmatpush1.msra.mxu0 0.0
    %967 = vmatprep.subr.mxu0 0.0
    %968 = vmatpush1.msra.mxu0 0.0
    %969 = vmatprep.subr.mxu0 0.0
    %970 = vmatpush1.msra.mxu0 0.0
    %971 = vmatprep.subr.mxu0 0.0
    %972 = vmatpush1.msra.mxu0 0.0
    %973 = vmatprep.subr.mxu0 0.0
    %974 = vmatpush1.msra.mxu0 0.0
    %975 = vmatprep.subr.mxu0 0.0
    %976 = vmatpush1.msra.mxu0 0.0
    %977 = vmatprep.subr.mxu0 0.0
    %978 = vmatpush1.msra.mxu0 0.0
    %979 = vmatprep.subr.mxu0 0.0
    %980 = vmatpush1.msra.mxu0 %v947
    %981 = vmatprep.subr.mxu0 0.0
    %982 = vmatpush2.msra.mxu0 0.0
    %983 = vmatprep.subr.mxu0 0.0
    %984 = vmatpush2.msra.mxu0 0.0
    %985 = vmatprep.subr.mxu0 0.0
    %986 = vmatpush2.msra.mxu0 0.0
    %987 = vmatprep.subr.mxu0 0.0
    %988 = vmatpush2.msra.mxu0 0.0
    %989 = vmatprep.subr.mxu0 0.0
    %990 = vmatpush2.msra.mxu0 0.0
    %991 = vmatprep.subr.mxu0 0.0
    %992 = vmatpush2.msra.mxu0 0.0
    %993 = vmatprep.subr.mxu0 0.0
    %994 = vmatpush2.msra.mxu0 0.0
    %995 = vmatprep.subr.mxu0 0.0
    %996 = vmatpush2.msra.mxu0 0.0
    %997 = vmatprep.subr.mxu0 0.0
    %998 = vmatpush2.msra.mxu0 0.0
    %999 = vmatprep.subr.mxu0 0.0
    %1000 = vmatpush2.msra.mxu0 0.0
    %1001 = vmatprep.subr.mxu0 0.0
    %1002 = vmatpush2.msra.mxu0 0.0
    %1003 = vmatprep.subr.mxu0 0.0
    %1004 = vmatpush2.msra.mxu0 0.0
    %1005 = vmatprep.subr.mxu0 0.0
    %1006 = vmatpush2.msra.mxu0 0.0
    %1007 = vmatprep.subr.mxu0 0.0
    %1008 = vmatpush2.msra.mxu0 0.0
    %1009 = vmatprep.subr.mxu0 0.0
    %1010 = vmatpush2.msra.mxu0 0.0
    %1011 = vmatprep.subr.mxu0 0.0
    %1012 = vmatpush2.msra.mxu0 0.0
    %1013 = vmatprep.mubr.f32.mxu0 0.0
    %1014 = vmatmul.mubr.f32.gmra.mxu0 %v929
    %v1015 = vpop.f32.mrf.mxu0
    %v1016 = vadd.f32 0.0, %v1015
    %v1017 = vpop.f32.mrf.mxu0
    %1018 = vmatprep.mubr.f32.mxu0 0.0
    %1019 = vmatmul.mubr.f32.gmra.mxu0 %v932
    %v1020 = vpop.f32.mrf.mxu0
    %v1021 = vadd.f32 0.0, %v1020
    %v1022 = vpop.f32.mrf.mxu0
    %1023 = vmatprep.mubr.f32.mxu0 0.0
    %1024 = vmatmul.mubr.f32.gmra.mxu0 %v935
    %v1025 = vpop.f32.mrf.mxu0
    %v1026 = vadd.f32 0.0, %v1025
    %v1027 = vpop.f32.mrf.mxu0
    %1028 = vmatprep.mubr.f32.mxu0 0.0
    %1029 = vmatmul.mubr.f32.gmra.mxu0 %v938
    %v1030 = vpop.f32.mrf.mxu0
    %v1031 = vadd.f32 0.0, %v1030
    %v1032 = vpop.f32.mrf.mxu0
    %1033 = vmatprep.mubr.f32.mxu0 0.0
    %1034 = vmatmul.mubr.f32.gmra.mxu0 %v941
    %v1035 = vpop.f32.mrf.mxu0
    %v1036 = vadd.f32 0.0, %v1035
    %v1037 = vpop.f32.mrf.mxu0
    %1038 = vmatprep.mubr.f32.mxu0 0.0
    %1039 = vmatmul.mubr.f32.gmra.mxu0 %v944
    %v1040 = vpop.f32.mrf.mxu0
    %v1041 = vadd.f32 0.0, %v1040
    %v1042 = vpop.f32.mrf.mxu0
    %1043 = vdwg.mxu0
    %v1044 = vxor.u32 %v925, 2147483648
    %v1045 = vxor.u32 %v926, 2147483648
    %v1046 = vmul.f32 %v1044, 1.442695
    %v1047 = vpow.pop %v1046
    %v1048 = vmul.f32 %v1045, 1.442695
    %v1049 = vpow.pop %v1048
    %v1050 = vadd.f32 %v1047, 1.0
    %v1051 = vadd.f32 %v1049, 1.0
    %v1052 = vrcp.pop %v1050
    %v1053 = vmul.f32 1.0, %v1052
    %v1054 = vrcp.pop %v1051
    %v1055 = vmul.f32 1.0, %v1054
    %v1056 = vld [vmem:[%s3 + $0x90] sm:$0xff]
    %v1057 = vld [vmem:[%s3 + $0x98] sm:$0xff]
    %v1058 = vld [vmem:[%s4 + $0x18] sm:$0x1]
    %v1059 = vlaneseq
    %v1060 = vshrl.u32 %v1059, 7
    %v1061 = vsub.s32 0, %v1060
    %v1062 = vrot.slane %v1058, %v1061
    %v1064 = vsel %vm505, %v1053, 0
    %v1067 = vsel %vm505, %v1055, 0
    %1069 = vmatprep.subr.mxu0 0.0
    %1070 = vmatpush1.msra.mxu0 0.0
    %1071 = vmatprep.subr.mxu0 0.0
    %1072 = vmatpush1.msra.mxu0 0.0
    %1073 = vmatprep.subr.mxu0 0.0
    %1074 = vmatpush1.msra.mxu0 0.0
    %1075 = vmatprep.subr.mxu0 0.0
    %1076 = vmatpush1.msra.mxu0 0.0
    %1077 = vmatprep.subr.mxu0 0.0
    %1078 = vmatpush1.msra.mxu0 0.0
    %1079 = vmatprep.subr.mxu0 0.0
    %1080 = vmatpush1.msra.mxu0 0.0
    %1081 = vmatprep.subr.mxu0 0.0
    %1082 = vmatpush1.msra.mxu0 0.0
    %1083 = vmatprep.subr.mxu0 0.0
    %1084 = vmatpush1.msra.mxu0 0.0
    %1085 = vmatprep.subr.mxu0 0.0
    %1086 = vmatpush1.msra.mxu0 0.0
    %1087 = vmatprep.subr.mxu0 0.0
    %1088 = vmatpush1.msra.mxu0 0.0
    %1089 = vmatprep.subr.mxu0 0.0
    %1090 = vmatpush1.msra.mxu0 0.0
    %1091 = vmatprep.subr.mxu0 0.0
    %1092 = vmatpush1.msra.mxu0 0.0
    %1093 = vmatprep.subr.mxu0 0.0
    %1094 = vmatpush1.msra.mxu0 0.0
    %1095 = vmatprep.subr.mxu0 0.0
    %1096 = vmatpush1.msra.mxu0 0.0
    %1097 = vmatprep.subr.mxu0 0.0
    %1098 = vmatpush1.msra.mxu0 %v1057
    %1099 = vmatprep.subr.mxu0 0.0
    %1100 = vmatpush1.msra.mxu0 %v1056
    %1101 = vmatprep.subr.mxu0 0.0
    %1102 = vmatpush2.msra.mxu0 0.0
    %1103 = vmatprep.subr.mxu0 0.0
    %1104 = vmatpush2.msra.mxu0 0.0
    %1105 = vmatprep.subr.mxu0 0.0
    %1106 = vmatpush2.msra.mxu0 0.0
    %1107 = vmatprep.subr.mxu0 0.0
    %1108 = vmatpush2.msra.mxu0 0.0
    %1109 = vmatprep.subr.mxu0 0.0
    %1110 = vmatpush2.msra.mxu0 0.0
    %1111 = vmatprep.subr.mxu0 0.0
    %1112 = vmatpush2.msra.mxu0 0.0
    %1113 = vmatprep.subr.mxu0 0.0
    %1114 = vmatpush2.msra.mxu0 0.0
    %1115 = vmatprep.subr.mxu0 0.0
    %1116 = vmatpush2.msra.mxu0 0.0
    %1117 = vmatprep.subr.mxu0 0.0
    %1118 = vmatpush2.msra.mxu0 0.0
    %1119 = vmatprep.subr.mxu0 0.0
    %1120 = vmatpush2.msra.mxu0 0.0
    %1121 = vmatprep.subr.mxu0 0.0
    %1122 = vmatpush2.msra.mxu0 0.0
    %1123 = vmatprep.subr.mxu0 0.0
    %1124 = vmatpush2.msra.mxu0 0.0
    %1125 = vmatprep.subr.mxu0 0.0
    %1126 = vmatpush2.msra.mxu0 0.0
    %1127 = vmatprep.subr.mxu0 0.0
    %1128 = vmatpush2.msra.mxu0 0.0
    %1129 = vmatprep.subr.mxu0 0.0
    %1130 = vmatpush2.msra.mxu0 0.0
    %1131 = vmatprep.subr.mxu0 0.0
    %1132 = vmatpush2.msra.mxu0 0.0
    %1133 = vmatprep.mubr.f32.mxu0 0.0
    %1134 = vmatmul.mubr.f32.gmra.mxu0 %v1064
    %v1135 = vpop.f32.mrf.mxu0
    %v1136 = vadd.f32 %v1062, %v1135
    %v1137 = vpop.f32.mrf.mxu0
    %1138 = vmatprep.mubr.f32.mxu0 0.0
    %1139 = vmatmul.mubr.f32.gmra.mxu0 %v1067
    %v1140 = vpop.f32.mrf.mxu0
    %v1141 = vadd.f32 %v1062, %v1140
    %v1142 = vpop.f32.mrf.mxu0
    %1143 = vdwg.mxu0
    %v1144 = vxor.u32 %v1136, 2147483648
    %v1145 = vxor.u32 %v1141, 2147483648
    %v1146 = vmul.f32 %v1144, 1.442695
    %v1147 = vpow.pop %v1146
    %v1148 = vmul.f32 %v1145, 1.442695
    %v1149 = vpow.pop %v1148
    %v1150 = vadd.f32 %v1147, 1.0
    %v1151 = vadd.f32 %v1149, 1.0
    %v1152 = vrcp.pop %v1150
    %v1153 = vmul.f32 1.0, %v1152
    %v1154 = vrcp.pop %v1151
    %v1155 = vmul.f32 1.0, %v1154
    %v1156 = vmul.f32 %v1016, %v1153
    %v1157 = vmul.f32 %v1021, %v1155
    %v1158 = vmul.f32 %v1026, %v1153
    %v1159 = vmul.f32 %v1031, %v1155
    %v1160 = vmul.f32 %v1036, %v1153
    %v1161 = vmul.f32 %v1041, %v1155
    %v1162 = vmax.f32 %v925, 0.0
    %v1163 = vmax.f32 %v926, 0.0
    %v1164 = vld [vmem:[%s3 + $0xa0] sm:$0xf]
    %v1166 = vsel %vm608, %v1156, 0
    %v1169 = vsel %vm608, %v1157, 0
    %v1172 = vsel %vm608, %v1158, 0
    %v1175 = vsel %vm608, %v1159, 0
    %v1178 = vsel %vm608, %v1160, 0
    %v1181 = vsel %vm608, %v1161, 0
    %v1184 = vsel %vm627, %v1164, 0
    %1186 = vmatprep.subr.mxu0 0.0
    %1187 = vmatpush1.msra.mxu0 0.0
    %1188 = vmatprep.subr.mxu0 0.0
    %1189 = vmatpush1.msra.mxu0 0.0
    %1190 = vmatprep.subr.mxu0 0.0
    %1191 = vmatpush1.msra.mxu0 0.0
    %1192 = vmatprep.subr.mxu0 0.0
    %1193 = vmatpush1.msra.mxu0 0.0
    %1194 = vmatprep.subr.mxu0 0.0
    %1195 = vmatpush1.msra.mxu0 0.0
    %1196 = vmatprep.subr.mxu0 0.0
    %1197 = vmatpush1.msra.mxu0 0.0
    %1198 = vmatprep.subr.mxu0 0.0
    %1199 = vmatpush1.msra.mxu0 0.0
    %1200 = vmatprep.subr.mxu0 0.0
    %1201 = vmatpush1.msra.mxu0 0.0
    %1202 = vmatprep.subr.mxu0 0.0
    %1203 = vmatpush1.msra.mxu0 0.0
    %1204 = vmatprep.subr.mxu0 0.0
    %1205 = vmatpush1.msra.mxu0 0.0
    %1206 = vmatprep.subr.mxu0 0.0
    %1207 = vmatpush1.msra.mxu0 0.0
    %1208 = vmatprep.subr.mxu0 0.0
    %1209 = vmatpush1.msra.mxu0 0.0
    %1210 = vmatprep.subr.mxu0 0.0
    %1211 = vmatpush1.msra.mxu0 0.0
    %1212 = vmatprep.subr.mxu0 0.0
    %1213 = vmatpush1.msra.mxu0 0.0
    %1214 = vmatprep.subr.mxu0 0.0
    %1215 = vmatpush1.msra.mxu0 0.0
    %1216 = vmatprep.subr.mxu0 0.0
    %1217 = vmatpush1.msra.mxu0 %v1184
    %1218 = vmatprep.subr.mxu0 0.0
    %1219 = vmatpush2.msra.mxu0 0.0
    %1220 = vmatprep.subr.mxu0 0.0
    %1221 = vmatpush2.msra.mxu0 0.0
    %1222 = vmatprep.subr.mxu0 0.0
    %1223 = vmatpush2.msra.mxu0 0.0
    %1224 = vmatprep.subr.mxu0 0.0
    %1225 = vmatpush2.msra.mxu0 0.0
    %1226 = vmatprep.subr.mxu0 0.0
    %1227 = vmatpush2.msra.mxu0 0.0
    %1228 = vmatprep.subr.mxu0 0.0
    %1229 = vmatpush2.msra.mxu0 0.0
    %1230 = vmatprep.subr.mxu0 0.0
    %1231 = vmatpush2.msra.mxu0 0.0
    %1232 = vmatprep.subr.mxu0 0.0
    %1233 = vmatpush2.msra.mxu0 0.0
    %1234 = vmatprep.subr.mxu0 0.0
    %1235 = vmatpush2.msra.mxu0 0.0
    %1236 = vmatprep.subr.mxu0 0.0
    %1237 = vmatpush2.msra.mxu0 0.0
    %1238 = vmatprep.subr.mxu0 0.0
    %1239 = vmatpush2.msra.mxu0 0.0
    %1240 = vmatprep.subr.mxu0 0.0
    %1241 = vmatpush2.msra.mxu0 0.0
    %1242 = vmatprep.subr.mxu0 0.0
    %1243 = vmatpush2.msra.mxu0 0.0
    %1244 = vmatprep.subr.mxu0 0.0
    %1245 = vmatpush2.msra.mxu0 0.0
    %1246 = vmatprep.subr.mxu0 0.0
    %1247 = vmatpush2.msra.mxu0 0.0
    %1248 = vmatprep.subr.mxu0 0.0
    %1249 = vmatpush2.msra.mxu0 0.0
    %1250 = vmatprep.mubr.f32.mxu0 0.0
    %1251 = vmatmul.mubr.f32.gmra.mxu0 %v1166
    %v1252 = vpop.f32.mrf.mxu0
    %v1253 = vadd.f32 0.0, %v1252
    %v1254 = vpop.f32.mrf.mxu0
    %1255 = vmatprep.mubr.f32.mxu0 0.0
    %1256 = vmatmul.mubr.f32.gmra.mxu0 %v1169
    %v1257 = vpop.f32.mrf.mxu0
    %v1258 = vadd.f32 0.0, %v1257
    %v1259 = vpop.f32.mrf.mxu0
    %1260 = vmatprep.mubr.f32.mxu0 0.0
    %1261 = vmatmul.mubr.f32.gmra.mxu0 %v1172
    %v1262 = vpop.f32.mrf.mxu0
    %v1263 = vadd.f32 0.0, %v1262
    %v1264 = vpop.f32.mrf.mxu0
    %1265 = vmatprep.mubr.f32.mxu0 0.0
    %1266 = vmatmul.mubr.f32.gmra.mxu0 %v1175
    %v1267 = vpop.f32.mrf.mxu0
    %v1268 = vadd.f32 0.0, %v1267
    %v1269 = vpop.f32.mrf.mxu0
    %1270 = vmatprep.mubr.f32.mxu0 0.0
    %1271 = vmatmul.mubr.f32.gmra.mxu0 %v1178
    %v1272 = vpop.f32.mrf.mxu0
    %v1273 = vadd.f32 0.0, %v1272
    %v1274 = vpop.f32.mrf.mxu0
    %1275 = vmatprep.mubr.f32.mxu0 0.0
    %1276 = vmatmul.mubr.f32.gmra.mxu0 %v1181
    %v1277 = vpop.f32.mrf.mxu0
    %v1278 = vadd.f32 0.0, %v1277
    %v1279 = vpop.f32.mrf.mxu0
    %1280 = vdwg.mxu0
    %v1281 = vmul.f32 %v1253, %v1253
    %v1282 = vmul.f32 %v1258, %v1258
    %v1283 = vmul.f32 %v1263, %v1263
    %v1284 = vmul.f32 %v1268, %v1268
    %v1285 = vadd.f32 %v1281, %v1283
    %v1286 = vadd.f32 %v1282, %v1284
    %v1287 = vmul.f32 %v1273, %v1273
    %v1288 = vmul.f32 %v1278, %v1278
    %v1289 = vadd.f32 %v1285, %v1287
    %v1290 = vadd.f32 %v1286, %v1288
    %v1291 = vmax.f32 %v1289, 1e-08
    %v1292 = vmax.f32 %v1290, 1e-08
    %v1293 = vrsqrt.pop %v1291
    %v1294 = vmul.f32 %v1291, %v1293
    %vm1295 = vcmp.eq.f32.partialorder %v1291, inf
    %v1296 = vsel %vm1295, %v1291, %v1294
    %vm1297 = vcmp.eq.f32.partialorder %v1291, 0.0
    %v1298 = vand.u32 %v1291, 2147483648
    %v1299 = vsel %vm1297, %v1298, %v1296
    %v1300 = vrsqrt.pop %v1292
    %v1301 = vmul.f32 %v1292, %v1300
    %vm1302 = vcmp.eq.f32.partialorder %v1292, inf
    %v1303 = vsel %vm1302, %v1292, %v1301
    %vm1304 = vcmp.eq.f32.partialorder %v1292, 0.0
    %v1305 = vand.u32 %v1292, 2147483648
    %v1306 = vsel %vm1304, %v1305, %v1303
    %v1307 = vld [vmem:[%s3 + $0xa8] sm:$0xff]
    %v1308 = vld [vmem:[%s3 + $0xb0] sm:$0xff]
    %v1309 = vld [vmem:[%s3 + $0xb8] sm:$0xf]
    %v1311 = vsel %vm608, %v1299, 0
    %v1314 = vsel %vm608, %v1306, 0
    %v1317 = vsel %vm627, %v1309, 0
    %1319 = vmatprep.subr.mxu0 0.0
    %1320 = vmatpush1.msra.mxu0 0.0
    %1321 = vmatprep.subr.mxu0 0.0
    %1322 = vmatpush1.msra.mxu0 0.0
    %1323 = vmatprep.subr.mxu0 0.0
    %1324 = vmatpush1.msra.mxu0 0.0
    %1325 = vmatprep.subr.mxu0 0.0
    %1326 = vmatpush1.msra.mxu0 0.0
    %1327 = vmatprep.subr.mxu0 0.0
    %1328 = vmatpush1.msra.mxu0 0.0
    %1329 = vmatprep.subr.mxu0 0.0
    %1330 = vmatpush1.msra.mxu0 0.0
    %1331 = vmatprep.subr.mxu0 0.0
    %1332 = vmatpush1.msra.mxu0 0.0
    %1333 = vmatprep.subr.mxu0 0.0
    %1334 = vmatpush1.msra.mxu0 0.0
    %1335 = vmatprep.subr.mxu0 0.0
    %1336 = vmatpush1.msra.mxu0 0.0
    %1337 = vmatprep.subr.mxu0 0.0
    %1338 = vmatpush1.msra.mxu0 0.0
    %1339 = vmatprep.subr.mxu0 0.0
    %1340 = vmatpush1.msra.mxu0 0.0
    %1341 = vmatprep.subr.mxu0 0.0
    %1342 = vmatpush1.msra.mxu0 0.0
    %1343 = vmatprep.subr.mxu0 0.0
    %1344 = vmatpush1.msra.mxu0 0.0
    %1345 = vmatprep.subr.mxu0 0.0
    %1346 = vmatpush1.msra.mxu0 0.0
    %1347 = vmatprep.subr.mxu0 0.0
    %1348 = vmatpush1.msra.mxu0 0.0
    %1349 = vmatprep.subr.mxu0 0.0
    %1350 = vmatpush1.msra.mxu0 %v1317
    %1351 = vmatprep.subr.mxu0 0.0
    %1352 = vmatpush2.msra.mxu0 0.0
    %1353 = vmatprep.subr.mxu0 0.0
    %1354 = vmatpush2.msra.mxu0 0.0
    %1355 = vmatprep.subr.mxu0 0.0
    %1356 = vmatpush2.msra.mxu0 0.0
    %1357 = vmatprep.subr.mxu0 0.0
    %1358 = vmatpush2.msra.mxu0 0.0
    %1359 = vmatprep.subr.mxu0 0.0
    %1360 = vmatpush2.msra.mxu0 0.0
    %1361 = vmatprep.subr.mxu0 0.0
    %1362 = vmatpush2.msra.mxu0 0.0
    %1363 = vmatprep.subr.mxu0 0.0
    %1364 = vmatpush2.msra.mxu0 0.0
    %1365 = vmatprep.subr.mxu0 0.0
    %1366 = vmatpush2.msra.mxu0 0.0
    %1367 = vmatprep.subr.mxu0 0.0
    %1368 = vmatpush2.msra.mxu0 0.0
    %1369 = vmatprep.subr.mxu0 0.0
    %1370 = vmatpush2.msra.mxu0 0.0
    %1371 = vmatprep.subr.mxu0 0.0
    %1372 = vmatpush2.msra.mxu0 0.0
    %1373 = vmatprep.subr.mxu0 0.0
    %1374 = vmatpush2.msra.mxu0 0.0
    %1375 = vmatprep.subr.mxu0 0.0
    %1376 = vmatpush2.msra.mxu0 0.0
    %1377 = vmatprep.subr.mxu0 0.0
    %1378 = vmatpush2.msra.mxu0 0.0
    %1379 = vmatprep.subr.mxu0 0.0
    %1380 = vmatpush2.msra.mxu0 0.0
    %1381 = vmatprep.subr.mxu0 0.0
    %1382 = vmatpush2.msra.mxu0 0.0
    %1383 = vmatprep.mubr.f32.mxu0 0.0
    %1384 = vmatmul.mubr.f32.gmra.mxu0 %v1311
    %v1385 = vpop.f32.mrf.mxu0
    %v1386 = vadd.f32 0.0, %v1385
    %v1387 = vpop.f32.mrf.mxu0
    %1388 = vmatprep.mubr.f32.mxu0 0.0
    %1389 = vmatmul.mubr.f32.gmra.mxu0 %v1314
    %v1390 = vpop.f32.mrf.mxu0
    %v1391 = vadd.f32 0.0, %v1390
    %v1392 = vpop.f32.mrf.mxu0
    %1393 = vdwg.mxu0
    %v1395 = vsel %vm505, %v1162, 0
    %v1398 = vsel %vm505, %v1163, 0
    %1400 = vmatprep.subr.mxu0 0.0
    %1401 = vmatpush1.msra.mxu0 0.0
    %1402 = vmatprep.subr.mxu0 0.0
    %1403 = vmatpush1.msra.mxu0 0.0
    %1404 = vmatprep.subr.mxu0 0.0
    %1405 = vmatpush1.msra.mxu0 0.0
    %1406 = vmatprep.subr.mxu0 0.0
    %1407 = vmatpush1.msra.mxu0 0.0
    %1408 = vmatprep.subr.mxu0 0.0
    %1409 = vmatpush1.msra.mxu0 0.0
    %1410 = vmatprep.subr.mxu0 0.0
    %1411 = vmatpush1.msra.mxu0 0.0
    %1412 = vmatprep.subr.mxu0 0.0
    %1413 = vmatpush1.msra.mxu0 0.0
    %1414 = vmatprep.subr.mxu0 0.0
    %1415 = vmatpush1.msra.mxu0 0.0
    %1416 = vmatprep.subr.mxu0 0.0
    %1417 = vmatpush1.msra.mxu0 0.0
    %1418 = vmatprep.subr.mxu0 0.0
    %1419 = vmatpush1.msra.mxu0 0.0
    %1420 = vmatprep.subr.mxu0 0.0
    %1421 = vmatpush1.msra.mxu0 0.0
    %1422 = vmatprep.subr.mxu0 0.0
    %1423 = vmatpush1.msra.mxu0 0.0
    %1424 = vmatprep.subr.mxu0 0.0
    %1425 = vmatpush1.msra.mxu0 0.0
    %1426 = vmatprep.subr.mxu0 0.0
    %1427 = vmatpush1.msra.mxu0 0.0
    %1428 = vmatprep.subr.mxu0 0.0
    %1429 = vmatpush1.msra.mxu0 %v1308
    %1430 = vmatprep.subr.mxu0 0.0
    %1431 = vmatpush1.msra.mxu0 %v1307
    %1432 = vmatprep.subr.mxu0 0.0
    %1433 = vmatpush2.msra.mxu0 0.0
    %1434 = vmatprep.subr.mxu0 0.0
    %1435 = vmatpush2.msra.mxu0 0.0
    %1436 = vmatprep.subr.mxu0 0.0
    %1437 = vmatpush2.msra.mxu0 0.0
    %1438 = vmatprep.subr.mxu0 0.0
    %1439 = vmatpush2.msra.mxu0 0.0
    %1440 = vmatprep.subr.mxu0 0.0
    %1441 = vmatpush2.msra.mxu0 0.0
    %1442 = vmatprep.subr.mxu0 0.0
    %1443 = vmatpush2.msra.mxu0 0.0
    %1444 = vmatprep.subr.mxu0 0.0
    %1445 = vmatpush2.msra.mxu0 0.0
    %1446 = vmatprep.subr.mxu0 0.0
    %1447 = vmatpush2.msra.mxu0 0.0
    %1448 = vmatprep.subr.mxu0 0.0
    %1449 = vmatpush2.msra.mxu0 0.0
    %1450 = vmatprep.subr.mxu0 0.0
    %1451 = vmatpush2.msra.mxu0 0.0
    %1452 = vmatprep.subr.mxu0 0.0
    %1453 = vmatpush2.msra.mxu0 0.0
    %1454 = vmatprep.subr.mxu0 0.0
    %1455 = vmatpush2.msra.mxu0 0.0
    %1456 = vmatprep.subr.mxu0 0.0
    %1457 = vmatpush2.msra.mxu0 0.0
    %1458 = vmatprep.subr.mxu0 0.0
    %1459 = vmatpush2.msra.mxu0 0.0
    %1460 = vmatprep.subr.mxu0 0.0
    %1461 = vmatpush2.msra.mxu0 0.0
    %1462 = vmatprep.subr.mxu0 0.0
    %1463 = vmatpush2.msra.mxu0 0.0
    %1464 = vmatprep.mubr.f32.mxu0 0.0
    %1465 = vmatmul.mubr.f32.gmra.mxu0 %v1395
    %v1466 = vpop.f32.mrf.mxu0
    %v1467 = vadd.f32 %v1386, %v1466
    %v1468 = vpop.f32.mrf.mxu0
    %1469 = vmatprep.mubr.f32.mxu0 0.0
    %1470 = vmatmul.mubr.f32.gmra.mxu0 %v1398
    %v1471 = vpop.f32.mrf.mxu0
    %v1472 = vadd.f32 %v1391, %v1471
    %v1473 = vpop.f32.mrf.mxu0
    %1474 = vdwg.mxu0
    %v1475 = vld [vmem:[%s4 + $0x20] sm:$0x1]
    %v1476 = vlaneseq
    %v1477 = vshrl.u32 %v1476, 7
    %v1478 = vsub.s32 0, %v1477
    %v1479 = vrot.slane %v1475, %v1478
    %v1480 = vadd.f32 %v1467, %v1479
    %v1481 = vadd.f32 %v1472, %v1479
    %v1482 = vld [vmem:[%s3 + $0xc0] sm:$0xf]
    %v1484 = vsel %vm608, %v1253, 0
    %v1487 = vsel %vm608, %v1258, 0
    %v1490 = vsel %vm608, %v1263, 0
    %v1493 = vsel %vm608, %v1268, 0
    %v1496 = vsel %vm608, %v1273, 0
    %v1499 = vsel %vm608, %v1278, 0
    %v1502 = vsel %vm627, %v1482, 0
    %1504 = vmatprep.subr.mxu0 0.0
    %1505 = vmatpush1.msra.mxu0 0.0
    %1506 = vmatprep.subr.mxu0 0.0
    %1507 = vmatpush1.msra.mxu0 0.0
    %1508 = vmatprep.subr.mxu0 0.0
    %1509 = vmatpush1.msra.mxu0 0.0
    %1510 = vmatprep.subr.mxu0 0.0
    %1511 = vmatpush1.msra.mxu0 0.0
    %1512 = vmatprep.subr.mxu0 0.0
    %1513 = vmatpush1.msra.mxu0 0.0
    %1514 = vmatprep.subr.mxu0 0.0
    %1515 = vmatpush1.msra.mxu0 0.0
    %1516 = vmatprep.subr.mxu0 0.0
    %1517 = vmatpush1.msra.mxu0 0.0
    %1518 = vmatprep.subr.mxu0 0.0
    %1519 = vmatpush1.msra.mxu0 0.0
    %1520 = vmatprep.subr.mxu0 0.0
    %1521 = vmatpush1.msra.mxu0 0.0
    %1522 = vmatprep.subr.mxu0 0.0
    %1523 = vmatpush1.msra.mxu0 0.0
    %1524 = vmatprep.subr.mxu0 0.0
    %1525 = vmatpush1.msra.mxu0 0.0
    %1526 = vmatprep.subr.mxu0 0.0
    %1527 = vmatpush1.msra.mxu0 0.0
    %1528 = vmatprep.subr.mxu0 0.0
    %1529 = vmatpush1.msra.mxu0 0.0
    %1530 = vmatprep.subr.mxu0 0.0
    %1531 = vmatpush1.msra.mxu0 0.0
    %1532 = vmatprep.subr.mxu0 0.0
    %1533 = vmatpush1.msra.mxu0 0.0
    %1534 = vmatprep.subr.mxu0 0.0
    %1535 = vmatpush1.msra.mxu0 %v1502
    %1536 = vmatprep.subr.mxu0 0.0
    %1537 = vmatpush2.msra.mxu0 0.0
    %1538 = vmatprep.subr.mxu0 0.0
    %1539 = vmatpush2.msra.mxu0 0.0
    %1540 = vmatprep.subr.mxu0 0.0
    %1541 = vmatpush2.msra.mxu0 0.0
    %1542 = vmatprep.subr.mxu0 0.0
    %1543 = vmatpush2.msra.mxu0 0.0
    %1544 = vmatprep.subr.mxu0 0.0
    %1545 = vmatpush2.msra.mxu0 0.0
    %1546 = vmatprep.subr.mxu0 0.0
    %1547 = vmatpush2.msra.mxu0 0.0
    %1548 = vmatprep.subr.mxu0 0.0
    %1549 = vmatpush2.msra.mxu0 0.0
    %1550 = vmatprep.subr.mxu0 0.0
    %1551 = vmatpush2.msra.mxu0 0.0
    %1552 = vmatprep.subr.mxu0 0.0
    %1553 = vmatpush2.msra.mxu0 0.0
    %1554 = vmatprep.subr.mxu0 0.0
    %1555 = vmatpush2.msra.mxu0 0.0
    %1556 = vmatprep.subr.mxu0 0.0
    %1557 = vmatpush2.msra.mxu0 0.0
    %1558 = vmatprep.subr.mxu0 0.0
    %1559 = vmatpush2.msra.mxu0 0.0
    %1560 = vmatprep.subr.mxu0 0.0
    %1561 = vmatpush2.msra.mxu0 0.0
    %1562 = vmatprep.subr.mxu0 0.0
    %1563 = vmatpush2.msra.mxu0 0.0
    %1564 = vmatprep.subr.mxu0 0.0
    %1565 = vmatpush2.msra.mxu0 0.0
    %1566 = vmatprep.subr.mxu0 0.0
    %1567 = vmatpush2.msra.mxu0 0.0
    %1568 = vmatprep.mubr.f32.mxu0 0.0
    %1569 = vmatmul.mubr.f32.gmra.mxu0 %v1484
    %v1570 = vpop.f32.mrf.mxu0
    %v1571 = vadd.f32 0.0, %v1570
    %v1572 = vpop.f32.mrf.mxu0
    %1573 = vmatprep.mubr.f32.mxu0 0.0
    %1574 = vmatmul.mubr.f32.gmra.mxu0 %v1487
    %v1575 = vpop.f32.mrf.mxu0
    %v1576 = vadd.f32 0.0, %v1575
    %v1577 = vpop.f32.mrf.mxu0
    %1578 = vmatprep.mubr.f32.mxu0 0.0
    %1579 = vmatmul.mubr.f32.gmra.mxu0 %v1490
    %v1580 = vpop.f32.mrf.mxu0
    %v1581 = vadd.f32 0.0, %v1580
    %v1582 = vpop.f32.mrf.mxu0
    %1583 = vmatprep.mubr.f32.mxu0 0.0
    %1584 = vmatmul.mubr.f32.gmra.mxu0 %v1493
    %v1585 = vpop.f32.mrf.mxu0
    %v1586 = vadd.f32 0.0, %v1585
    %v1587 = vpop.f32.mrf.mxu0
    %1588 = vmatprep.mubr.f32.mxu0 0.0
    %1589 = vmatmul.mubr.f32.gmra.mxu0 %v1496
    %v1590 = vpop.f32.mrf.mxu0
    %v1591 = vadd.f32 0.0, %v1590
    %v1592 = vpop.f32.mrf.mxu0
    %1593 = vmatprep.mubr.f32.mxu0 0.0
    %1594 = vmatmul.mubr.f32.gmra.mxu0 %v1499
    %v1595 = vpop.f32.mrf.mxu0
    %v1596 = vadd.f32 0.0, %v1595
    %v1597 = vpop.f32.mrf.mxu0
    %1598 = vdwg.mxu0
    %v1599 = vld [vmem:[%s3 + $0xc8] sm:$0xff]
    %v1600 = vld [vmem:[%s3 + $0xd0] sm:$0xff]
    %v1601 = vld [vmem:[%s4 + $0x28] sm:$0x1]
    %v1602 = vlaneseq
    %v1603 = vshrl.u32 %v1602, 7
    %v1604 = vsub.s32 0, %v1603
    %v1605 = vrot.slane %v1601, %v1604
    %v1607 = vsel %vm505, %v1480, 0
    %v1610 = vsel %vm505, %v1481, 0
    %1612 = vmatprep.subr.mxu0 0.0
    %1613 = vmatpush1.msra.mxu0 0.0
    %1614 = vmatprep.subr.mxu0 0.0
    %1615 = vmatpush1.msra.mxu0 0.0
    %1616 = vmatprep.subr.mxu0 0.0
    %1617 = vmatpush1.msra.mxu0 0.0
    %1618 = vmatprep.subr.mxu0 0.0
    %1619 = vmatpush1.msra.mxu0 0.0
    %1620 = vmatprep.subr.mxu0 0.0
    %1621 = vmatpush1.msra.mxu0 0.0
    %1622 = vmatprep.subr.mxu0 0.0
    %1623 = vmatpush1.msra.mxu0 0.0
    %1624 = vmatprep.subr.mxu0 0.0
    %1625 = vmatpush1.msra.mxu0 0.0
    %1626 = vmatprep.subr.mxu0 0.0
    %1627 = vmatpush1.msra.mxu0 0.0
    %1628 = vmatprep.subr.mxu0 0.0
    %1629 = vmatpush1.msra.mxu0 0.0
    %1630 = vmatprep.subr.mxu0 0.0
    %1631 = vmatpush1.msra.mxu0 0.0
    %1632 = vmatprep.subr.mxu0 0.0
    %1633 = vmatpush1.msra.mxu0 0.0
    %1634 = vmatprep.subr.mxu0 0.0
    %1635 = vmatpush1.msra.mxu0 0.0
    %1636 = vmatprep.subr.mxu0 0.0
    %1637 = vmatpush1.msra.mxu0 0.0
    %1638 = vmatprep.subr.mxu0 0.0
    %1639 = vmatpush1.msra.mxu0 0.0
    %1640 = vmatprep.subr.mxu0 0.0
    %1641 = vmatpush1.msra.mxu0 %v1600
    %1642 = vmatprep.subr.mxu0 0.0
    %1643 = vmatpush1.msra.mxu0 %v1599
    %1644 = vmatprep.subr.mxu0 0.0
    %1645 = vmatpush2.msra.mxu0 0.0
    %1646 = vmatprep.subr.mxu0 0.0
    %1647 = vmatpush2.msra.mxu0 0.0
    %1648 = vmatprep.subr.mxu0 0.0
    %1649 = vmatpush2.msra.mxu0 0.0
    %1650 = vmatprep.subr.mxu0 0.0
    %1651 = vmatpush2.msra.mxu0 0.0
    %1652 = vmatprep.subr.mxu0 0.0
    %1653 = vmatpush2.msra.mxu0 0.0
    %1654 = vmatprep.subr.mxu0 0.0
    %1655 = vmatpush2.msra.mxu0 0.0
    %1656 = vmatprep.subr.mxu0 0.0
    %1657 = vmatpush2.msra.mxu0 0.0
    %1658 = vmatprep.subr.mxu0 0.0
    %1659 = vmatpush2.msra.mxu0 0.0
    %1660 = vmatprep.subr.mxu0 0.0
    %1661 = vmatpush2.msra.mxu0 0.0
    %1662 = vmatprep.subr.mxu0 0.0
    %1663 = vmatpush2.msra.mxu0 0.0
    %1664 = vmatprep.subr.mxu0 0.0
    %1665 = vmatpush2.msra.mxu0 0.0
    %1666 = vmatprep.subr.mxu0 0.0
    %1667 = vmatpush2.msra.mxu0 0.0
    %1668 = vmatprep.subr.mxu0 0.0
    %1669 = vmatpush2.msra.mxu0 0.0
    %1670 = vmatprep.subr.mxu0 0.0
    %1671 = vmatpush2.msra.mxu0 0.0
    %1672 = vmatprep.subr.mxu0 0.0
    %1673 = vmatpush2.msra.mxu0 0.0
    %1674 = vmatprep.subr.mxu0 0.0
    %1675 = vmatpush2.msra.mxu0 0.0
    %1676 = vmatprep.mubr.f32.mxu0 0.0
    %1677 = vmatmul.mubr.f32.gmra.mxu0 %v1607
    %v1678 = vpop.f32.mrf.mxu0
    %v1679 = vadd.f32 %v1605, %v1678
    %v1680 = vpop.f32.mrf.mxu0
    %1681 = vmatprep.mubr.f32.mxu0 0.0
    %1682 = vmatmul.mubr.f32.gmra.mxu0 %v1610
    %v1683 = vpop.f32.mrf.mxu0
    %v1684 = vadd.f32 %v1605, %v1683
    %v1685 = vpop.f32.mrf.mxu0
    %1686 = vdwg.mxu0
    %v1687 = vxor.u32 %v1679, 2147483648
    %v1688 = vxor.u32 %v1684, 2147483648
    %v1689 = vmul.f32 %v1687, 1.442695
    %v1690 = vpow.pop %v1689
    %v1691 = vmul.f32 %v1688, 1.442695
    %v1692 = vpow.pop %v1691
    %v1693 = vadd.f32 %v1690, 1.0
    %v1694 = vadd.f32 %v1692, 1.0
    %v1695 = vrcp.pop %v1693
    %v1696 = vmul.f32 1.0, %v1695
    %v1697 = vrcp.pop %v1694
    %v1698 = vmul.f32 1.0, %v1697
    %v1699 = vmul.f32 %v1571, %v1696
    %v1700 = vmul.f32 %v1576, %v1698
    %v1701 = vmul.f32 %v1581, %v1696
    %v1702 = vmul.f32 %v1586, %v1698
    %v1703 = vmul.f32 %v1591, %v1696
    %v1704 = vmul.f32 %v1596, %v1698
    %1707 = vrot.lane.b32.xlu0 %v1699, 16
    %v1708 = vpop.permute.xlu0 %1707
    %1709 = vrot.lane.b32.xlu0 %v1700, 16
    %v1710 = vpop.permute.xlu0 %1709
    %1715 = vrot.lane.b32.xlu0 %v1701, 20
    %v1716 = vpop.permute.xlu0 %1715
    %1717 = vrot.lane.b32.xlu0 %v1702, 20
    %v1718 = vpop.permute.xlu0 %1717
    %1723 = vrot.lane.b32.xlu0 %v1703, 24
    %v1724 = vpop.permute.xlu0 %1723
    %1725 = vrot.lane.b32.xlu0 %v1704, 24
    %v1726 = vpop.permute.xlu0 %1725
    %v1729 = vsel %vm505, %v1480, %v1708
    %v1730 = vsel %vm505, %v1481, %v1710
    %vm1731 = vcmask 162816
    %v1732 = vsel %vm1731, %v1729, %v1716
    %v1733 = vsel %vm1731, %v1730, %v1718
    %vm1734 = vcmask 195584
    %v1735 = vsel %vm1734, %v1732, %v1724
    %v1736 = vsel %vm1734, %v1733, %v1726
    %vm1737 = vcmask 228352
    %v1738 = vsel %vm1737, %v1735, 0.0
    %v1739 = vsel %vm1737, %v1736, 0.0
    %s1740 = smul.u32 0, 8
    %v1741 = vld [vmem:[%s0] sm:$0x1]
    %v1742 = vlaneseq
    %v1743 = vshrl.u32 %v1742, 7
    %v1744 = vstv %s1740
    %v1745 = vadd.s32 %v1744, %v1743
    %v1746 = vlaneseq
    %v1747 = vshrl.u32 %v1746, 7
    %v1748 = vsub.s32 0, %v1747
    %v1749 = vrot.slane %v1741, %v1748
    %vm1750 = vcmp.eq.s32.totalorder %v1745, %v1749
    %v1751 = vsel %vm1750, 1, 0
    %v1752 = vcvt.s32.f32 %v1751
    %v1753 = vld [vmem:[#allocation2] sm:$0xff]
    %v1755 = vsel %vm505, %v1752, 0
    %1757 = vmatprep.subr.mxu0 0.0
    %1758 = vmatpush1.msra.mxu0 0.0
    %1759 = vmatprep.subr.mxu0 0.0
    %1760 = vmatpush1.msra.mxu0 0.0
    %1761 = vmatprep.subr.mxu0 0.0
    %1762 = vmatpush1.msra.mxu0 0.0
    %1763 = vmatprep.subr.mxu0 0.0
    %1764 = vmatpush1.msra.mxu0 0.0
    %1765 = vmatprep.subr.mxu0 0.0
    %1766 = vmatpush1.msra.mxu0 0.0
    %1767 = vmatprep.subr.mxu0 0.0
    %1768 = vmatpush1.msra.mxu0 0.0
    %1769 = vmatprep.subr.mxu0 0.0
    %1770 = vmatpush1.msra.mxu0 0.0
    %1771 = vmatprep.subr.mxu0 0.0
    %1772 = vmatpush1.msra.mxu0 0.0
    %1773 = vmatprep.subr.mxu0 0.0
    %1774 = vmatpush1.msra.mxu0 0.0
    %1775 = vmatprep.subr.mxu0 0.0
    %1776 = vmatpush1.msra.mxu0 0.0
    %1777 = vmatprep.subr.mxu0 0.0
    %1778 = vmatpush1.msra.mxu0 0.0
    %1779 = vmatprep.subr.mxu0 0.0
    %1780 = vmatpush1.msra.mxu0 0.0
    %1781 = vmatprep.subr.mxu0 0.0
    %1782 = vmatpush1.msra.mxu0 0.0
    %1783 = vmatprep.subr.mxu0 0.0
    %1784 = vmatpush1.msra.mxu0 0.0
    %1785 = vmatprep.subr.mxu0 0.0
    %1786 = vmatpush1.msra.mxu0 %v1739
    %1787 = vmatprep.subr.mxu0 0.0
    %1788 = vmatpush1.msra.mxu0 %v1738
    %1789 = vmatprep.subr.mxu0 0.0
    %1790 = vmatpush2.msra.mxu0 0.0
    %1791 = vmatprep.subr.mxu0 0.0
    %1792 = vmatpush2.msra.mxu0 0.0
    %1793 = vmatprep.subr.mxu0 0.0
    %1794 = vmatpush2.msra.mxu0 0.0
    %1795 = vmatprep.subr.mxu0 0.0
    %1796 = vmatpush2.msra.mxu0 0.0
    %1797 = vmatprep.subr.mxu0 0.0
    %1798 = vmatpush2.msra.mxu0 0.0
    %1799 = vmatprep.subr.mxu0 0.0
    %1800 = vmatpush2.msra.mxu0 0.0
    %1801 = vmatprep.subr.mxu0 0.0
    %1802 = vmatpush2.msra.mxu0 0.0
    %1803 = vmatprep.subr.mxu0 0.0
    %1804 = vmatpush2.msra.mxu0 0.0
    %1805 = vmatprep.subr.mxu0 0.0
    %1806 = vmatpush2.msra.mxu0 0.0
    %1807 = vmatprep.subr.mxu0 0.0
    %1808 = vmatpush2.msra.mxu0 0.0
    %1809 = vmatprep.subr.mxu0 0.0
    %1810 = vmatpush2.msra.mxu0 0.0
    %1811 = vmatprep.subr.mxu0 0.0
    %1812 = vmatpush2.msra.mxu0 0.0
    %1813 = vmatprep.subr.mxu0 0.0
    %1814 = vmatpush2.msra.mxu0 0.0
    %1815 = vmatprep.subr.mxu0 0.0
    %1816 = vmatpush2.msra.mxu0 0.0
    %1817 = vmatprep.subr.mxu0 0.0
    %1818 = vmatpush2.msra.mxu0 0.0
    %1819 = vmatprep.subr.mxu0 0.0
    %1820 = vmatpush2.msra.mxu0 0.0
    %1821 = vmatprep.mubr.f32.mxu0 0.0
    %1822 = vmatmul.mubr.f32.gmra.mxu0 %v1755
    %v1823 = vpop.f32.mrf.mxu0
    %v1824 = vadd.f32 0.0, %v1823
    %v1825 = vpop.f32.mrf.mxu0
    %1826 = vdwg.mxu0
    %v1827 = vadd.f32 %v1753, %v1824
    %1828 = vst [vmem:[#allocation2] sm:$0xff] %v1827
    // Predicated region
    $region26: #{tpu_custom_call.1} parent=1 // pred_check
      %p1829 = pneg %p21
    $region27: #{tpu_custom_call.1} parent=1 // pred_check_branch
      %1831 = sbr.rel (%p1829) target = $region29
    $region28: #{tpu_custom_call.1} parent=1 // pred_region
      %v1832 = vld [vmem:[#allocation2] sm:$0xff]
      %v1833 = vld [vmem:[%s2] sm:$0xff]
      %1835 = vset.pattern.permute.xlu0 0
      %1836 = vperm.xlu0 %1835, %v1833
      %v1837 = vpop.permute.xlu0 %1836
      %v1839 = vmul.f32 %v1832, %v1837
      %1840 = vst [vmem:[#allocation2] sm:$0xff] %v1839
    $region29: #{tpu_custom_call.1} parent=1 // pred_fallthru
      _
    // Predicated region
    $region30: #{tpu_custom_call.1} parent=1 // pred_check
      _
    $region31: #{tpu_custom_call.1} parent=1 // pred_check_branch
      %1842 = sbr.rel (0) target = $region33
    $region32: #{tpu_custom_call.1} parent=1 // pred_region
      %s1844 = ssub.s32 128, 128
      %1845 = vsyncadd [#allocation3], %s1844
      %s1847 = sshll.u32 [#allocation2], 4
      %s1848 = int_to_ptr.vmem [resolvable:$true] %s1847
      %1850 = dma.vmem_to_hbm [thread:$0]  %s1848, 128, %s5, [#allocation3]
    $region33: #{tpu_custom_call.1} parent=1 // pred_fallthru
      _
    // Predicated region
    $region34: #{tpu_custom_call.1} parent=1 // pred_check
      _
    $region35: #{tpu_custom_call.1} parent=1 // pred_check_branch
      %1852 = sbr.rel (0) target = $region37
    $region36: #{tpu_custom_call.1} parent=1 // pred_region
      %1853 = dma.done [#allocation3], 128
    $region37: #{tpu_custom_call.1} parent=1 // pred_fallthru
      _
    %1854 = vsyncpa [#allocation3], 1

</llo_original>
